<compile_context>
chip_gen: v5e
topology: v5e:2x2
jax: 0.10.0
libtpu: 0.0.40
codegen_flags: <defaults>
</compile_context>

<pallas_src>
import functools

import jax
import jax.numpy as jnp
from jax.experimental import pallas as pl
from jax.experimental.pallas import tpu as pltpu


# ----------------------------- kernel ------------------------------------- #

def _layer_norm(h, w, b, eps=1e-5):
    # One-pass variance: E[x^2] - mu^2 (halves the cross-lane reductions).
    mu = jnp.mean(h, axis=-1, keepdims=True)
    var = jnp.mean(h * h, axis=-1, keepdims=True) - mu * mu
    inv = jax.lax.rsqrt(var + eps)
    return (h - mu) * (w * inv) + b


def _mlp(h2, wfc, bfc, wproj, bproj, chunk_rows):
    """fc -> QuickGELU -> proj, optionally tiled over row chunks of R so the
    f32 [R, 4D] intermediate never exists in full (v7x VMEM)."""
    R = h2.shape[0]

    def one_chunk(h2c):
        hfc = jnp.dot(h2c.astype(jnp.bfloat16), wfc,
                      preferred_element_type=jnp.float32) + bfc
        hfc = hfc * jax.nn.sigmoid(1.702 * hfc)            # QuickGELU, f32
        return jnp.dot(hfc.astype(jnp.bfloat16), wproj,
                       preferred_element_type=jnp.float32) + bproj

    if chunk_rows is None or chunk_rows >= R or R % chunk_rows != 0:
        return one_chunk(h2)
    outs = []
    for c in range(R // chunk_rows):
        outs.append(one_chunk(h2[c * chunk_rows:(c + 1) * chunk_rows]))
    return jnp.concatenate(outs, axis=0)


def transformer_block_kernel(x_ref,
                             ln1w_ref, ln1b_ref, wqkv_ref, bqkv_ref,
                             wo_ref, bo_ref, ln2w_ref, ln2b_ref,
                             wfc_ref, bfc_ref, wproj_ref, bproj_ref,
                             out_ref, *, n_head, mlp_chunk_rows):
    NB, L, D = out_ref.shape
    R = NB * L
    hd = D // n_head

    # Layer 0: seed the carried (VMEM-resident across the layer axis) residual
    # state from the pipelined input block.  The input block index is constant
    # across the layer axis, so Pallas fetches it once per batch block and
    # prefetches the next block's input during the previous block's compute.
    @pl.when(pl.program_id(1) == 0)
    def _():
        out_ref[...] = x_ref[...]

    x = out_ref[...].reshape(R, D)                         # carried state, f32

    # ---------------- attention branch (pre-LN) ---------------- #
    h = _layer_norm(x, ln1w_ref[0], ln1b_ref[0])
    # Single [R, D] @ [D, 3D] projection; weights pre-transposed host-side,
    # 1/sqrt(hd) folded into the Q columns; bf16 MXU inputs, f32 accumulation.
    qkv = jnp.dot(h.astype(jnp.bfloat16), wqkv_ref[0],
                  preferred_element_type=jnp.float32) + bqkv_ref[0]
    qkv_bf = qkv.astype(jnp.bfloat16)                      # one wide cast

    # Per-head scores (batched over the batch-block dim), single softmax over
    # the stacked [H, NB, L, L] score tensor.
    scores = []
    for hh in range(n_head):
        q_h = qkv_bf[:, hh * hd:(hh + 1) * hd].reshape(NB, L, hd)
        k_h = qkv_bf[:, D + hh * hd:D + (hh + 1) * hd].reshape(NB, L, hd)
        scores.append(jnp.einsum('nqc,nkc->nqk', q_h, k_h,
                                 preferred_element_type=jnp.float32))
    s = jnp.stack(scores, axis=0)                          # [H, NB, L, L] f32
    s = s - jnp.max(s, axis=-1, keepdims=True)
    p = jnp.exp(s)
    p = p / jnp.sum(p, axis=-1, keepdims=True)
    p = p.astype(jnp.bfloat16)

    # P @ V per head, immediately folded into the output projection:
    # attn += O_h @ Wo[h*hd:(h+1)*hd, :]  (lane-dense f32 accumulation,
    # no per-head masked stores, no bf16 scratch round-trip).
    wo = wo_ref[0]                                         # [D, D] bf16
    attn = jnp.zeros((NB, L, D), jnp.float32)
    for hh in range(n_head):
        v_h = qkv_bf[:, 2 * D + hh * hd:2 * D + (hh + 1) * hd].reshape(
            NB, L, hd)
        o_h = jnp.einsum('nqk,nkc->nqc', p[hh], v_h,
                         preferred_element_type=jnp.float32)
        attn = attn + jnp.einsum('nqc,cd->nqd', o_h.astype(jnp.bfloat16),
                                 wo[hh * hd:(hh + 1) * hd, :],
                                 preferred_element_type=jnp.float32)
    x = x + attn.reshape(R, D) + bo_ref[0]

    # ---------------- MLP branch (pre-LN, QuickGELU) ---------------- #
    h2 = _layer_norm(x, ln2w_ref[0], ln2b_ref[0])
    x = x + _mlp(h2, wfc_ref[0], bfc_ref[0], wproj_ref[0], bproj_ref[0],
                 mlp_chunk_rows)

    out_ref[...] = x.reshape(NB, L, D)


# ----------------------------- wrapper ------------------------------------ #

_PARAM_ORDER = ('ln1w', 'ln1b', 'wqkv', 'bqkv', 'wo', 'bo',
                'ln2w', 'ln2b', 'wfc', 'bfc', 'wproj', 'bproj')


def transformer_forward(x_lnd, kparams, n_head, *, batch_blocks=1,
                        mlp_chunk_rows=None, vmem_limit_bytes=None):
    """x_lnd: [L, N, D] float32 (PyTorch convention). Returns [L, N, D].

    Tuning notes (perf review):
      * v5e/v6e (128 MiB VMEM): raise vmem_limit_bytes (~96-110 MiB), grow NB
        so batch_blocks -> 1 (weights streamed from HBM once).
      * v7x (64 MiB VMEM, 2 TCs): keep batch_blocks == 2 (one block per core),
        vmem_limit_bytes ~40-48 MiB, set mlp_chunk_rows (e.g. 256-512) so the
        f32 [R, 4D] MLP intermediate stays bounded, and re-derive NB from the
        live-set arithmetic rather than reusing the v6e block size.
    """
    L, N, D = x_lnd.shape
    layers = kparams['ln1w'].shape[0]
    assert D % n_head == 0
    assert N % batch_blocks == 0
    NB = N // batch_blocks

    x = jnp.transpose(x_lnd, (1, 0, 2)).astype(jnp.float32)     # [N, L, D]
    kernel = functools.partial(transformer_block_kernel, n_head=n_head,
                               mlp_chunk_rows=mlp_chunk_rows)

    in_specs = [pl.BlockSpec((NB, L, D), lambda b, l: (b, 0, 0))]
    args = [x]
    for name in _PARAM_ORDER:
        p = kparams[name]                                        # [layers, r, c]
        in_specs.append(pl.BlockSpec((1,) + tuple(p.shape[1:]),
                                     lambda b, l: (l, 0, 0)))
        args.append(p)

    cp_kwargs = dict(dimension_semantics=("parallel", "arbitrary"))
    if vmem_limit_bytes is not None:
        cp_kwargs["vmem_limit_bytes"] = vmem_limit_bytes

    # TODO(synk): if the consumer tolerates bf16, emit a bf16 output (carried
    # state kept f32 in a VMEM scratch, cast on last-layer writeback) to halve
    # the HBM writeback.
    out = pl.pallas_call(
        kernel,
        out_shape=jax.ShapeDtypeStruct((N, L, D), jnp.float32),
        grid=(batch_blocks, layers),
        in_specs=in_specs,
        out_specs=pl.BlockSpec((NB, L, D), lambda b, l: (b, 0, 0)),
        compiler_params=pltpu.CompilerParams(**cp_kwargs),
    )(*args)
    return jnp.transpose(out, (1, 0, 2))


# -------------------------- params & reference ----------------------------- #

def init_params(key, width, layers):
    """Parameters in PyTorch layout (out_features, in_features)."""
    D = width
    ks = jax.random.split(key, 6 * layers)

    def wrnd(k, shape, scale=0.02):
        w = (scale * jax.random.normal(k, shape)).astype(jnp.float32)
        return w.astype(jnp.bfloat16).astype(jnp.float32)   # bf16-representable

    def brnd(k, shape, scale=0.02):
        return (scale * jax.random.normal(k, shape)).astype(jnp.float32)

    return {
        'ln1w': jnp.ones((layers, D), jnp.float32),
        'ln1b': jnp.zeros((layers, D), jnp.float32),
        'ln2w': jnp.ones((layers, D), jnp.float32),
        'ln2b': jnp.zeros((layers, D), jnp.float32),
        'wqkv': jnp.stack([wrnd(ks[6 * l + 0], (3 * D, D)) for l in range(layers)]),
        'bqkv': jnp.stack([brnd(ks[6 * l + 4], (3 * D,)) for l in range(layers)]),
        'wo': jnp.stack([wrnd(ks[6 * l + 1], (D, D)) for l in range(layers)]),
        'bo': jnp.zeros((layers, D), jnp.float32),
        'wfc': jnp.stack([wrnd(ks[6 * l + 2], (4 * D, D)) for l in range(layers)]),
        'bfc': jnp.stack([brnd(ks[6 * l + 5], (4 * D,)) for l in range(layers)]),
        'wproj': jnp.stack([wrnd(ks[6 * l + 3], (D, 4 * D)) for l in range(layers)]),
        'bproj': jnp.zeros((layers, D), jnp.float32),
    }


def prepare_kernel_params(params, n_head):
    """Host-side prep: fold Q scale, pre-transpose weights, cast to bf16."""
    layers, D = params['ln1w'].shape
    hd = D // n_head
    scale = 1.0 / float(hd) ** 0.5

    qscale = jnp.concatenate([jnp.full((D,), scale, jnp.float32),
                              jnp.ones((2 * D,), jnp.float32)])
    wqkv = params['wqkv'] * qscale[None, :, None]        # scale the Q rows
    bqkv = params['bqkv'] * qscale[None, :]

    def t(w):  # [layers, out, in] -> [layers, in, out] (contraction leading)
        return jnp.transpose(w, (0, 2, 1)).astype(jnp.bfloat16)

    return {
        'ln1w': params['ln1w'][:, None, :],
        'ln1b': params['ln1b'][:, None, :],
        'ln2w': params['ln2w'][:, None, :],
        'ln2b': params['ln2b'][:, None, :],
        'wqkv': t(wqkv),
        'bqkv': bqkv[:, None, :].astype(jnp.float32),
        'wo': t(params['wo']),
        'bo': params['bo'][:, None, :].astype(jnp.float32),
        'wfc': t(params['wfc']),
        'bfc': params['bfc'][:, None, :].astype(jnp.float32),
        'wproj': t(params['wproj']),
        'bproj': params['bproj'][:, None, :].astype(jnp.float32),
    }


def reference_forward(x_lnd, params, n_head):
    """Pure-JAX f32 reference with PyTorch semantics."""
    L, N, D = x_lnd.shape
    hd = D // n_head
    scale = 1.0 / float(hd) ** 0.5
    x = jnp.transpose(x_lnd, (1, 0, 2)).astype(jnp.float32)     # [N, L, D]
    layers = params['ln1w'].shape[0]
    for l in range(layers):
        h = _layer_norm(x, params['ln1w'][l], params['ln1b'][l])
        qkv = h @ params['wqkv'][l].T + params['bqkv'][l]
        q, k, v = jnp.split(qkv, 3, axis=-1)
        q = q.reshape(N, L, n_head, hd)
        k = k.reshape(N, L, n_head, hd)
        v = v.reshape(N, L, n_head, hd)
        s = jnp.einsum('nqhd,nkhd->nhqk', q * scale, k)
        p = jax.nn.softmax(s, axis=-1)
        o = jnp.einsum('nhqk,nkhd->nqhd', p, v).reshape(N, L, D)
        x = x + o @ params['wo'][l].T + params['bo'][l]
        h2 = _layer_norm(x, params['ln2w'][l], params['ln2b'][l])
        hfc = h2 @ params['wfc'][l].T + params['bfc'][l]
        hfc = hfc * jax.nn.sigmoid(1.702 * hfc)
        x = x + hfc @ params['wproj'][l].T + params['bproj'][l]
    return jnp.transpose(x, (1, 0, 2))


# ------------------------------- main -------------------------------------- #

if __name__ == "__main__":
    # D=128 keeps every lane dim a full vreg width.
    width, layers, heads = 128, 2, 4
    L, N = 8, 2

    key = jax.random.PRNGKey(0)
    k_x, k_p = jax.random.split(key)
    x = jax.random.normal(k_x, (L, N, width), dtype=jnp.float32)
    params = init_params(k_p, width, layers)
    kparams = prepare_kernel_params(params, heads)

    out = transformer_forward(x, kparams, heads, batch_blocks=2)
    out = jax.block_until_ready(out)

    ref = jax.block_until_ready(reference_forward(x, params, heads))
    max_diff = float(jnp.max(jnp.abs(out - ref)))
    assert out.shape == (L, N, width)
    # Kernel uses bf16 matmul inputs (f32 accumulation), so the tolerance
    # reflects bf16 rounding, not f32.
    assert max_diff < 1e-2, f"mismatch vs reference: {max_diff}"

    print("KERNEL_OK")
</pallas_src>

<mosaic_0001>
module attributes {stable_mosaic.version = 11 : i64} {
  func.func @transformer_block_kernel(%arg0: i32, %arg1: i32, %arg2: memref<1x8x128xf32, #tpu.memory_space<vmem>>, %arg3: memref<1x1x128xf32, #tpu.memory_space<vmem>>, %arg4: memref<1x1x128xf32, #tpu.memory_space<vmem>>, %arg5: memref<1x128x384xbf16, #tpu.memory_space<vmem>>, %arg6: memref<1x1x384xf32, #tpu.memory_space<vmem>>, %arg7: memref<1x128x128xbf16, #tpu.memory_space<vmem>>, %arg8: memref<1x1x128xf32, #tpu.memory_space<vmem>>, %arg9: memref<1x1x128xf32, #tpu.memory_space<vmem>>, %arg10: memref<1x1x128xf32, #tpu.memory_space<vmem>>, %arg11: memref<1x128x512xbf16, #tpu.memory_space<vmem>>, %arg12: memref<1x1x512xf32, #tpu.memory_space<vmem>>, %arg13: memref<1x512x128xbf16, #tpu.memory_space<vmem>>, %arg14: memref<1x1x128xf32, #tpu.memory_space<vmem>>, %arg15: memref<1x8x128xf32, #tpu.memory_space<vmem>>) attributes {dimension_semantics = [#tpu.dimension_semantics<parallel>, #tpu.dimension_semantics<arbitrary>], iteration_bounds = array<i64: 2, 2>, scalar_prefetch = 0 : i64, scratch_operands = 0 : i64, tpu.core_type = #tpu.core_type<tc>, window_params = [{transform_indices = @transform_0, window_bounds = array<i64: 1, 8, 128>}, {transform_indices = @transform_1, window_bounds = array<i64: 1, 1, 128>}, {transform_indices = @transform_2, window_bounds = array<i64: 1, 1, 128>}, {transform_indices = @transform_3, window_bounds = array<i64: 1, 128, 384>}, {transform_indices = @transform_4, window_bounds = array<i64: 1, 1, 384>}, {transform_indices = @transform_5, window_bounds = array<i64: 1, 128, 128>}, {transform_indices = @transform_6, window_bounds = array<i64: 1, 1, 128>}, {transform_indices = @transform_7, window_bounds = array<i64: 1, 1, 128>}, {transform_indices = @transform_8, window_bounds = array<i64: 1, 1, 128>}, {transform_indices = @transform_9, window_bounds = array<i64: 1, 128, 512>}, {transform_indices = @transform_10, window_bounds = array<i64: 1, 1, 512>}, {transform_indices = @transform_11, window_bounds = array<i64: 1, 512, 128>}, {transform_indices = @transform_12, window_bounds = array<i64: 1, 1, 128>}, {transform_indices = @transform_13, window_bounds = array<i64: 1, 8, 128>}]} {
    %c0_i32 = arith.constant 0 : i32
    %0 = arith.cmpi eq, %arg1, %c0_i32 : i32
    %1 = arith.extui %0 : i1 to i32
    %c0_i32_0 = arith.constant 0 : i32
    %2 = arith.cmpi ne, %1, %c0_i32_0 : i32
    scf.if %2 {
      %c0_71 = arith.constant 0 : index
      %c0_72 = arith.constant 0 : index
      %c0_73 = arith.constant 0 : index
      %173 = vector.load %arg2[%c0_71, %c0_72, %c0_73] : memref<1x8x128xf32, #tpu.memory_space<vmem>>, vector<1x8x128xf32>
      %c0_74 = arith.constant 0 : index
      %c0_75 = arith.constant 0 : index
      %c0_76 = arith.constant 0 : index
      %174 = vector.load %arg15[%c0_74, %c0_75, %c0_76] : memref<1x8x128xf32, #tpu.memory_space<vmem>>, vector<1x8x128xf32>
      tpu.vector_store %arg15[%c0_74, %c0_75, %c0_76], %173 {strides = array<i32>} : memref<1x8x128xf32, #tpu.memory_space<vmem>>, vector<1x8x128xf32>,
    } else {
    }
    %c0 = arith.constant 0 : index
    %c0_1 = arith.constant 0 : index
    %c0_2 = arith.constant 0 : index
    %3 = vector.load %arg15[%c0, %c0_1, %c0_2] : memref<1x8x128xf32, #tpu.memory_space<vmem>>, vector<1x8x128xf32>
    %4 = vector.shape_cast %3 : vector<1x8x128xf32> to vector<8x128xf32>
    %c0_3 = arith.constant 0 : index
    %c0_4 = arith.constant 0 : index
    %c0_5 = arith.constant 0 : index
    %5 = vector.load %arg3[%c0_3, %c0_4, %c0_5] : memref<1x1x128xf32, #tpu.memory_space<vmem>>, vector<1x1x128xf32>
    %6 = vector.shape_cast %5 : vector<1x1x128xf32> to vector<1x128xf32>
    %c0_6 = arith.constant 0 : index
    %c0_7 = arith.constant 0 : index
    %c0_8 = arith.constant 0 : index
    %7 = vector.load %arg4[%c0_6, %c0_7, %c0_8] : memref<1x1x128xf32, #tpu.memory_space<vmem>>, vector<1x1x128xf32>
    %8 = vector.shape_cast %7 : vector<1x1x128xf32> to vector<1x128xf32>
    %cst = arith.constant dense<0.000000e+00> : vector<8xf32>
    %9 = vector.multi_reduction <add>, %4, %cst [1] : vector<8x128xf32> to vector<8xf32>
    %10 = vector.shape_cast %9 : vector<8xf32> to vector<8x1xf32>
    %cst_9 = arith.constant 1.280000e+02 : f32
    %11 = vector.broadcast %cst_9 : f32 to vector<8x1xf32>
    %12 = arith.divf %10, %11 : vector<8x1xf32>
    %13 = arith.mulf %4, %4 : vector<8x128xf32>
    %cst_10 = arith.constant dense<0.000000e+00> : vector<8xf32>
    %14 = vector.multi_reduction <add>, %13, %cst_10 [1] : vector<8x128xf32> to vector<8xf32>
    %15 = vector.shape_cast %14 : vector<8xf32> to vector<8x1xf32>
    %cst_11 = arith.constant 1.280000e+02 : f32
    %16 = vector.broadcast %cst_11 : f32 to vector<8x1xf32>
    %17 = arith.divf %15, %16 : vector<8x1xf32>
    %18 = arith.mulf %12, %12 : vector<8x1xf32>
    %19 = arith.subf %17, %18 : vector<8x1xf32>
    %cst_12 = arith.constant 9.99999974E-6 : f32
    %20 = vector.broadcast %cst_12 : f32 to vector<8x1xf32>
    %21 = arith.addf %19, %20 : vector<8x1xf32>
    %22 = math.rsqrt %21 : vector<8x1xf32>
    %23 = vector.broadcast %12 : vector<8x1xf32> to vector<8x128xf32>
    %24 = arith.subf %4, %23 : vector<8x128xf32>
    %25 = vector.broadcast %6 : vector<1x128xf32> to vector<8x128xf32>
    %26 = vector.broadcast %22 : vector<8x1xf32> to vector<8x128xf32>
    %27 = arith.mulf %25, %26 : vector<8x128xf32>
    %28 = arith.mulf %24, %27 : vector<8x128xf32>
    %29 = vector.broadcast %8 : vector<1x128xf32> to vector<8x128xf32>
    %30 = arith.addf %28, %29 : vector<8x128xf32>
    %31 = arith.truncf %30 : vector<8x128xf32> to vector<8x128xbf16>
    %c0_13 = arith.constant 0 : index
    %c0_14 = arith.constant 0 : index
    %c0_15 = arith.constant 0 : index
    %32 = vector.load %arg5[%c0_13, %c0_14, %c0_15] : memref<1x128x384xbf16, #tpu.memory_space<vmem>>, vector<1x128x384xbf16>
    %33 = vector.shape_cast %32 : vector<1x128x384xbf16> to vector<128x384xbf16>
    %cst_16 = arith.constant dense<0.000000e+00> : vector<8x384xf32>
    %34 = tpu.matmul %31, %33, %cst_16 {dimension_numbers = #tpu.dot_dimension_numbers<[1], [0], [0], [1], [0, 0, 1, 1], [], []>} : vector<8x128xbf16>, vector<128x384xbf16>, vector<8x384xf32> -> vector<8x384xf32>
    %c0_17 = arith.constant 0 : index
    %c0_18 = arith.constant 0 : index
    %c0_19 = arith.constant 0 : index
    %35 = vector.load %arg6[%c0_17, %c0_18, %c0_19] : memref<1x1x384xf32, #tpu.memory_space<vmem>>, vector<1x1x384xf32>
    %36 = vector.shape_cast %35 : vector<1x1x384xf32> to vector<1x384xf32>
    %37 = vector.broadcast %36 : vector<1x384xf32> to vector<8x384xf32>
    %38 = arith.addf %34, %37 : vector<8x384xf32>
    %39 = arith.truncf %38 : vector<8x384xf32> to vector<8x384xbf16>
    %40 = vector.extract_strided_slice %39 {offsets = [0, 0], sizes = [8, 32], strides = [1, 1]} : vector<8x384xbf16> to vector<8x32xbf16>
    %41 = vector.shape_cast %40 : vector<8x32xbf16> to vector<1x8x32xbf16>
    %42 = vector.extract_strided_slice %39 {offsets = [0, 128], sizes = [8, 32], strides = [1, 1]} : vector<8x384xbf16> to vector<8x32xbf16>
    %43 = vector.shape_cast %42 : vector<8x32xbf16> to vector<1x8x32xbf16>
    "tpu.trace_start"() <{level = 10 : i32, message = "nqc,nkc->nqk"}> : () -> ()
    %cst_20 = arith.constant dense<0.000000e+00> : vector<1x8x8xf32>
    %44 = tpu.matmul %41, %43, %cst_20 {dimension_numbers = #tpu.dot_dimension_numbers<[2], [2], [1], [1], [0, 0, 0, 1, 1, 1], [0], [0]>} : vector<1x8x32xbf16>, vector<1x8x32xbf16>, vector<1x8x8xf32> -> vector<1x8x8xf32>
    "tpu.trace_stop"() : () -> ()
    %45 = vector.extract_strided_slice %39 {offsets = [0, 32], sizes = [8, 32], strides = [1, 1]} : vector<8x384xbf16> to vector<8x32xbf16>
    %46 = vector.shape_cast %45 : vector<8x32xbf16> to vector<1x8x32xbf16>
    %47 = vector.extract_strided_slice %39 {offsets = [0, 160], sizes = [8, 32], strides = [1, 1]} : vector<8x384xbf16> to vector<8x32xbf16>
    %48 = vector.shape_cast %47 : vector<8x32xbf16> to vector<1x8x32xbf16>
    "tpu.trace_start"() <{level = 10 : i32, message = "nqc,nkc->nqk"}> : () -> ()
    %cst_21 = arith.constant dense<0.000000e+00> : vector<1x8x8xf32>
    %49 = tpu.matmul %46, %48, %cst_21 {dimension_numbers = #tpu.dot_dimension_numbers<[2], [2], [1], [1], [0, 0, 0, 1, 1, 1], [0], [0]>} : vector<1x8x32xbf16>, vector<1x8x32xbf16>, vector<1x8x8xf32> -> vector<1x8x8xf32>
    "tpu.trace_stop"() : () -> ()
    %50 = vector.extract_strided_slice %39 {offsets = [0, 64], sizes = [8, 32], strides = [1, 1]} : vector<8x384xbf16> to vector<8x32xbf16>
    %51 = vector.shape_cast %50 : vector<8x32xbf16> to vector<1x8x32xbf16>
    %52 = vector.extract_strided_slice %39 {offsets = [0, 192], sizes = [8, 32], strides = [1, 1]} : vector<8x384xbf16> to vector<8x32xbf16>
    %53 = vector.shape_cast %52 : vector<8x32xbf16> to vector<1x8x32xbf16>
    "tpu.trace_start"() <{level = 10 : i32, message = "nqc,nkc->nqk"}> : () -> ()
    %cst_22 = arith.constant dense<0.000000e+00> : vector<1x8x8xf32>
    %54 = tpu.matmul %51, %53, %cst_22 {dimension_numbers = #tpu.dot_dimension_numbers<[2], [2], [1], [1], [0, 0, 0, 1, 1, 1], [0], [0]>} : vector<1x8x32xbf16>, vector<1x8x32xbf16>, vector<1x8x8xf32> -> vector<1x8x8xf32>
    "tpu.trace_stop"() : () -> ()
    %55 = vector.extract_strided_slice %39 {offsets = [0, 96], sizes = [8, 32], strides = [1, 1]} : vector<8x384xbf16> to vector<8x32xbf16>
    %56 = vector.shape_cast %55 : vector<8x32xbf16> to vector<1x8x32xbf16>
    %57 = vector.extract_strided_slice %39 {offsets = [0, 224], sizes = [8, 32], strides = [1, 1]} : vector<8x384xbf16> to vector<8x32xbf16>
    %58 = vector.shape_cast %57 : vector<8x32xbf16> to vector<1x8x32xbf16>
    "tpu.trace_start"() <{level = 10 : i32, message = "nqc,nkc->nqk"}> : () -> ()
    %cst_23 = arith.constant dense<0.000000e+00> : vector<1x8x8xf32>
    %59 = tpu.matmul %56, %58, %cst_23 {dimension_numbers = #tpu.dot_dimension_numbers<[2], [2], [1], [1], [0, 0, 0, 1, 1, 1], [0], [0]>} : vector<1x8x32xbf16>, vector<1x8x32xbf16>, vector<1x8x8xf32> -> vector<1x8x8xf32>
    "tpu.trace_stop"() : () -> ()
    %60 = vector.shape_cast %44 : vector<1x8x8xf32> to vector<1x1x8x8xf32>
    %61 = vector.shape_cast %49 : vector<1x8x8xf32> to vector<1x1x8x8xf32>
    %62 = vector.shape_cast %54 : vector<1x8x8xf32> to vector<1x1x8x8xf32>
    %63 = vector.shape_cast %59 : vector<1x8x8xf32> to vector<1x1x8x8xf32>
    %64 = tpu.concatenate %60, %61, %62, %63 in 0 : vector<1x1x8x8xf32>, vector<1x1x8x8xf32>, vector<1x1x8x8xf32>, vector<1x1x8x8xf32> -> vector<4x1x8x8xf32>
    %cst_24 = arith.constant dense<0xFF800000> : vector<4x1x8xf32>
    %65 = vector.multi_reduction <maximumf>, %64, %cst_24 [3] : vector<4x1x8x8xf32> to vector<4x1x8xf32>
    %66 = vector.shape_cast %65 : vector<4x1x8xf32> to vector<4x1x8x1xf32>
    %67 = vector.broadcast %66 : vector<4x1x8x1xf32> to vector<4x1x8x8xf32>
    %68 = arith.subf %64, %67 : vector<4x1x8x8xf32>
    %69 = math.exp %68 : vector<4x1x8x8xf32>
    %cst_25 = arith.constant dense<0.000000e+00> : vector<4x1x8xf32>
    %70 = vector.multi_reduction <add>, %69, %cst_25 [3] : vector<4x1x8x8xf32> to vector<4x1x8xf32>
    %71 = vector.shape_cast %70 : vector<4x1x8xf32> to vector<4x1x8x1xf32>
    %72 = vector.broadcast %71 : vector<4x1x8x1xf32> to vector<4x1x8x8xf32>
    %73 = arith.divf %69, %72 : vector<4x1x8x8xf32>
    %74 = arith.truncf %73 : vector<4x1x8x8xf32> to vector<4x1x8x8xbf16>
    %c0_26 = arith.constant 0 : index
    %c0_27 = arith.constant 0 : index
    %c0_28 = arith.constant 0 : index
    %75 = vector.load %arg7[%c0_26, %c0_27, %c0_28] : memref<1x128x128xbf16, #tpu.memory_space<vmem>>, vector<1x128x128xbf16>
    %76 = vector.shape_cast %75 : vector<1x128x128xbf16> to vector<128x128xbf16>
    %cst_29 = arith.constant 0.000000e+00 : f32
    %77 = vector.broadcast %cst_29 : f32 to vector<1x8x128xf32>
    %78 = vector.extract_strided_slice %39 {offsets = [0, 256], sizes = [8, 32], strides = [1, 1]} : vector<8x384xbf16> to vector<8x32xbf16>
    %79 = vector.shape_cast %78 : vector<8x32xbf16> to vector<1x8x32xbf16>
    %80 = vector.extract_strided_slice %74 {offsets = [0, 0, 0, 0], sizes = [1, 1, 8, 8], strides = [1, 1, 1, 1]} : vector<4x1x8x8xbf16> to vector<1x1x8x8xbf16>
    %81 = vector.shape_cast %80 : vector<1x1x8x8xbf16> to vector<1x8x8xbf16>
    "tpu.trace_start"() <{level = 10 : i32, message = "nqk,nkc->nqc"}> : () -> ()
    %cst_30 = arith.constant dense<0.000000e+00> : vector<1x8x32xf32>
    %82 = tpu.matmul %81, %79, %cst_30 {dimension_numbers = #tpu.dot_dimension_numbers<[2], [1], [1], [2], [0, 0, 0, 1, 1, 2], [0], [0]>} : vector<1x8x8xbf16>, vector<1x8x32xbf16>, vector<1x8x32xf32> -> vector<1x8x32xf32>
    "tpu.trace_stop"() : () -> ()
    %83 = arith.truncf %82 : vector<1x8x32xf32> to vector<1x8x32xbf16>
    %84 = vector.extract_strided_slice %76 {offsets = [0, 0], sizes = [32, 128], strides = [1, 1]} : vector<128x128xbf16> to vector<32x128xbf16>
    "tpu.trace_start"() <{level = 10 : i32, message = "nqc,cd->nqd"}> : () -> ()
    %cst_31 = arith.constant dense<0.000000e+00> : vector<1x8x128xf32>
    %85 = tpu.matmul %83, %84, %cst_31 {dimension_numbers = #tpu.dot_dimension_numbers<[2], [0], [0, 1], [1], [0, 0, 0, 1, 1, 1], [], []>} : vector<1x8x32xbf16>, vector<32x128xbf16>, vector<1x8x128xf32> -> vector<1x8x128xf32>
    "tpu.trace_stop"() : () -> ()
    %86 = arith.addf %77, %85 : vector<1x8x128xf32>
    %87 = vector.extract_strided_slice %39 {offsets = [0, 288], sizes = [8, 32], strides = [1, 1]} : vector<8x384xbf16> to vector<8x32xbf16>
    %88 = vector.shape_cast %87 : vector<8x32xbf16> to vector<1x8x32xbf16>
    %89 = vector.extract_strided_slice %74 {offsets = [1, 0, 0, 0], sizes = [1, 1, 8, 8], strides = [1, 1, 1, 1]} : vector<4x1x8x8xbf16> to vector<1x1x8x8xbf16>
    %90 = vector.shape_cast %89 : vector<1x1x8x8xbf16> to vector<1x8x8xbf16>
    "tpu.trace_start"() <{level = 10 : i32, message = "nqk,nkc->nqc"}> : () -> ()
    %cst_32 = arith.constant dense<0.000000e+00> : vector<1x8x32xf32>
    %91 = tpu.matmul %90, %88, %cst_32 {dimension_numbers = #tpu.dot_dimension_numbers<[2], [1], [1], [2], [0, 0, 0, 1, 1, 2], [0], [0]>} : vector<1x8x8xbf16>, vector<1x8x32xbf16>, vector<1x8x32xf32> -> vector<1x8x32xf32>
    "tpu.trace_stop"() : () -> ()
    %92 = arith.truncf %91 : vector<1x8x32xf32> to vector<1x8x32xbf16>
    %93 = vector.extract_strided_slice %76 {offsets = [32, 0], sizes = [32, 128], strides = [1, 1]} : vector<128x128xbf16> to vector<32x128xbf16>
    "tpu.trace_start"() <{level = 10 : i32, message = "nqc,cd->nqd"}> : () -> ()
    %cst_33 = arith.constant dense<0.000000e+00> : vector<1x8x128xf32>
    %94 = tpu.matmul %92, %93, %cst_33 {dimension_numbers = #tpu.dot_dimension_numbers<[2], [0], [0, 1], [1], [0, 0, 0, 1, 1, 1], [], []>} : vector<1x8x32xbf16>, vector<32x128xbf16>, vector<1x8x128xf32> -> vector<1x8x128xf32>
    "tpu.trace_stop"() : () -> ()
    %95 = arith.addf %86, %94 : vector<1x8x128xf32>
    %96 = vector.extract_strided_slice %39 {offsets = [0, 320], sizes = [8, 32], strides = [1, 1]} : vector<8x384xbf16> to vector<8x32xbf16>
    %97 = vector.shape_cast %96 : vector<8x32xbf16> to vector<1x8x32xbf16>
    %98 = vector.extract_strided_slice %74 {offsets = [2, 0, 0, 0], sizes = [1, 1, 8, 8], strides = [1, 1, 1, 1]} : vector<4x1x8x8xbf16> to vector<1x1x8x8xbf16>
    %99 = vector.shape_cast %98 : vector<1x1x8x8xbf16> to vector<1x8x8xbf16>
    "tpu.trace_start"() <{level = 10 : i32, message = "nqk,nkc->nqc"}> : () -> ()
    %cst_34 = arith.constant dense<0.000000e+00> : vector<1x8x32xf32>
    %100 = tpu.matmul %99, %97, %cst_34 {dimension_numbers = #tpu.dot_dimension_numbers<[2], [1], [1], [2], [0, 0, 0, 1, 1, 2], [0], [0]>} : vector<1x8x8xbf16>, vector<1x8x32xbf16>, vector<1x8x32xf32> -> vector<1x8x32xf32>
    "tpu.trace_stop"() : () -> ()
    %101 = arith.truncf %100 : vector<1x8x32xf32> to vector<1x8x32xbf16>
    %102 = vector.extract_strided_slice %76 {offsets = [64, 0], sizes = [32, 128], strides = [1, 1]} : vector<128x128xbf16> to vector<32x128xbf16>
    "tpu.trace_start"() <{level = 10 : i32, message = "nqc,cd->nqd"}> : () -> ()
    %cst_35 = arith.constant dense<0.000000e+00> : vector<1x8x128xf32>
    %103 = tpu.matmul %101, %102, %cst_35 {dimension_numbers = #tpu.dot_dimension_numbers<[2], [0], [0, 1], [1], [0, 0, 0, 1, 1, 1], [], []>} : vector<1x8x32xbf16>, vector<32x128xbf16>, vector<1x8x128xf32> -> vector<1x8x128xf32>
    "tpu.trace_stop"() : () -> ()
    %104 = arith.addf %95, %103 : vector<1x8x128xf32>
    %105 = vector.extract_strided_slice %39 {offsets = [0, 352], sizes = [8, 32], strides = [1, 1]} : vector<8x384xbf16> to vector<8x32xbf16>
    %106 = vector.shape_cast %105 : vector<8x32xbf16> to vector<1x8x32xbf16>
    %107 = vector.extract_strided_slice %74 {offsets = [3, 0, 0, 0], sizes = [1, 1, 8, 8], strides = [1, 1, 1, 1]} : vector<4x1x8x8xbf16> to vector<1x1x8x8xbf16>
    %108 = vector.shape_cast %107 : vector<1x1x8x8xbf16> to vector<1x8x8xbf16>
    "tpu.trace_start"() <{level = 10 : i32, message = "nqk,nkc->nqc"}> : () -> ()
    %cst_36 = arith.constant dense<0.000000e+00> : vector<1x8x32xf32>
    %109 = tpu.matmul %108, %106, %cst_36 {dimension_numbers = #tpu.dot_dimension_numbers<[2], [1], [1], [2], [0, 0, 0, 1, 1, 2], [0], [0]>} : vector<1x8x8xbf16>, vector<1x8x32xbf16>, vector<1x8x32xf32> -> vector<1x8x32xf32>
    "tpu.trace_stop"() : () -> ()
    %110 = arith.truncf %109 : vector<1x8x32xf32> to vector<1x8x32xbf16>
    %111 = vector.extract_strided_slice %76 {offsets = [96, 0], sizes = [32, 128], strides = [1, 1]} : vector<128x128xbf16> to vector<32x128xbf16>
    "tpu.trace_start"() <{level = 10 : i32, message = "nqc,cd->nqd"}> : () -> ()
    %cst_37 = arith.constant dense<0.000000e+00> : vector<1x8x128xf32>
    %112 = tpu.matmul %110, %111, %cst_37 {dimension_numbers = #tpu.dot_dimension_numbers<[2], [0], [0, 1], [1], [0, 0, 0, 1, 1, 1], [], []>} : vector<1x8x32xbf16>, vector<32x128xbf16>, vector<1x8x128xf32> -> vector<1x8x128xf32>
    "tpu.trace_stop"() : () -> ()
    %113 = arith.addf %104, %112 : vector<1x8x128xf32>
    %114 = vector.shape_cast %113 : vector<1x8x128xf32> to vector<8x128xf32>
    %115 = arith.addf %4, %114 : vector<8x128xf32>
    %c0_38 = arith.constant 0 : index
    %c0_39 = arith.constant 0 : index
    %c0_40 = arith.constant 0 : index
    %116 = vector.load %arg8[%c0_38, %c0_39, %c0_40] : memref<1x1x128xf32, #tpu.memory_space<vmem>>, vector<1x1x128xf32>
    %117 = vector.shape_cast %116 : vector<1x1x128xf32> to vector<1x128xf32>
    %118 = vector.broadcast %117 : vector<1x128xf32> to vector<8x128xf32>
    %119 = arith.addf %115, %118 : vector<8x128xf32>
    %c0_41 = arith.constant 0 : index
    %c0_42 = arith.constant 0 : index
    %c0_43 = arith.constant 0 : index
    %120 = vector.load %arg9[%c0_41, %c0_42, %c0_43] : memref<1x1x128xf32, #tpu.memory_space<vmem>>, vector<1x1x128xf32>
    %121 = vector.shape_cast %120 : vector<1x1x128xf32> to vector<1x128xf32>
    %c0_44 = arith.constant 0 : index
    %c0_45 = arith.constant 0 : index
    %c0_46 = arith.constant 0 : index
    %122 = vector.load %arg10[%c0_44, %c0_45, %c0_46] : memref<1x1x128xf32, #tpu.memory_space<vmem>>, vector<1x1x128xf32>
    %123 = vector.shape_cast %122 : vector<1x1x128xf32> to vector<1x128xf32>
    %cst_47 = arith.constant dense<0.000000e+00> : vector<8xf32>
    %124 = vector.multi_reduction <add>, %119, %cst_47 [1] : vector<8x128xf32> to vector<8xf32>
    %125 = vector.shape_cast %124 : vector<8xf32> to vector<8x1xf32>
    %cst_48 = arith.constant 1.280000e+02 : f32
    %126 = vector.broadcast %cst_48 : f32 to vector<8x1xf32>
    %127 = arith.divf %125, %126 : vector<8x1xf32>
    %128 = arith.mulf %119, %119 : vector<8x128xf32>
    %cst_49 = arith.constant dense<0.000000e+00> : vector<8xf32>
    %129 = vector.multi_reduction <add>, %128, %cst_49 [1] : vector<8x128xf32> to vector<8xf32>
    %130 = vector.shape_cast %129 : vector<8xf32> to vector<8x1xf32>
    %cst_50 = arith.constant 1.280000e+02 : f32
    %131 = vector.broadcast %cst_50 : f32 to vector<8x1xf32>
    %132 = arith.divf %130, %131 : vector<8x1xf32>
    %133 = arith.mulf %127, %127 : vector<8x1xf32>
    %134 = arith.subf %132, %133 : vector<8x1xf32>
    %cst_51 = arith.constant 9.99999974E-6 : f32
    %135 = vector.broadcast %cst_51 : f32 to vector<8x1xf32>
    %136 = arith.addf %134, %135 : vector<8x1xf32>
    %137 = math.rsqrt %136 : vector<8x1xf32>
    %138 = vector.broadcast %127 : vector<8x1xf32> to vector<8x128xf32>
    %139 = arith.subf %119, %138 : vector<8x128xf32>
    %140 = vector.broadcast %121 : vector<1x128xf32> to vector<8x128xf32>
    %141 = vector.broadcast %137 : vector<8x1xf32> to vector<8x128xf32>
    %142 = arith.mulf %140, %141 : vector<8x128xf32>
    %143 = arith.mulf %139, %142 : vector<8x128xf32>
    %144 = vector.broadcast %123 : vector<1x128xf32> to vector<8x128xf32>
    %145 = arith.addf %143, %144 : vector<8x128xf32>
    %c0_52 = arith.constant 0 : index
    %c0_53 = arith.constant 0 : index
    %c0_54 = arith.constant 0 : index
    %146 = vector.load %arg11[%c0_52, %c0_53, %c0_54] : memref<1x128x512xbf16, #tpu.memory_space<vmem>>, vector<1x128x512xbf16>
    %147 = vector.shape_cast %146 : vector<1x128x512xbf16> to vector<128x512xbf16>
    %c0_55 = arith.constant 0 : index
    %c0_56 = arith.constant 0 : index
    %c0_57 = arith.constant 0 : index
    %148 = vector.load %arg12[%c0_55, %c0_56, %c0_57] : memref<1x1x512xf32, #tpu.memory_space<vmem>>, vector<1x1x512xf32>
    %149 = vector.shape_cast %148 : vector<1x1x512xf32> to vector<1x512xf32>
    %c0_58 = arith.constant 0 : index
    %c0_59 = arith.constant 0 : index
    %c0_60 = arith.constant 0 : index
    %150 = vector.load %arg13[%c0_58, %c0_59, %c0_60] : memref<1x512x128xbf16, #tpu.memory_space<vmem>>, vector<1x512x128xbf16>
    %151 = vector.shape_cast %150 : vector<1x512x128xbf16> to vector<512x128xbf16>
    %c0_61 = arith.constant 0 : index
    %c0_62 = arith.constant 0 : index
    %c0_63 = arith.constant 0 : index
    %152 = vector.load %arg14[%c0_61, %c0_62, %c0_63] : memref<1x1x128xf32, #tpu.memory_space<vmem>>, vector<1x1x128xf32>
    %153 = vector.shape_cast %152 : vector<1x1x128xf32> to vector<1x128xf32>
    %154 = arith.truncf %145 : vector<8x128xf32> to vector<8x128xbf16>
    %cst_64 = arith.constant dense<0.000000e+00> : vector<8x512xf32>
    %155 = tpu.matmul %154, %147, %cst_64 {dimension_numbers = #tpu.dot_dimension_numbers<[1], [0], [0], [1], [0, 0, 1, 1], [], []>} : vector<8x128xbf16>, vector<128x512xbf16>, vector<8x512xf32> -> vector<8x512xf32>
    %156 = vector.broadcast %149 : vector<1x512xf32> to vector<8x512xf32>
    %157 = arith.addf %155, %156 : vector<8x512xf32>
    %cst_65 = arith.constant 1.702000e+00 : f32
    %158 = vector.broadcast %cst_65 : f32 to vector<8x512xf32>
    %159 = arith.mulf %158, %157 : vector<8x512xf32>
    %160 = arith.negf %159 : vector<8x512xf32>
    %161 = math.exp %160 : vector<8x512xf32>
    %cst_66 = arith.constant 1.000000e+00 : f32
    %162 = vector.broadcast %cst_66 : f32 to vector<8x512xf32>
    %163 = arith.addf %162, %161 : vector<8x512xf32>
    %164 = arith.divf %162, %163 : vector<8x512xf32>
    %165 = arith.mulf %157, %164 : vector<8x512xf32>
    %166 = arith.truncf %165 : vector<8x512xf32> to vector<8x512xbf16>
    %cst_67 = arith.constant dense<0.000000e+00> : vector<8x128xf32>
    %167 = tpu.matmul %166, %151, %cst_67 {dimension_numbers = #tpu.dot_dimension_numbers<[1], [0], [0], [1], [0, 0, 1, 1], [], []>} : vector<8x512xbf16>, vector<512x128xbf16>, vector<8x128xf32> -> vector<8x128xf32>
    %168 = vector.broadcast %153 : vector<1x128xf32> to vector<8x128xf32>
    %169 = arith.addf %167, %168 : vector<8x128xf32>
    %170 = arith.addf %119, %169 : vector<8x128xf32>
    %171 = vector.shape_cast %170 : vector<8x128xf32> to vector<1x8x128xf32>
    %c0_68 = arith.constant 0 : index
    %c0_69 = arith.constant 0 : index
    %c0_70 = arith.constant 0 : index
    %172 = vector.load %arg15[%c0_68, %c0_69, %c0_70] : memref<1x8x128xf32, #tpu.memory_space<vmem>>, vector<1x8x128xf32>
    tpu.vector_store %arg15[%c0_68, %c0_69, %c0_70], %171 {strides = array<i32>} : memref<1x8x128xf32, #tpu.memory_space<vmem>>, vector<1x8x128xf32>,
    return
  }
  func.func @transform_0(%arg0: i32, %arg1: i32) -> (i32, i32, i32) {
    %c0_i32 = arith.constant 0 : i32
    %c0_i32_0 = arith.constant 0 : i32
    %c0_i32_1 = arith.constant 0 : i32
    return %arg0, %c0_i32, %c0_i32_0 : i32, i32, i32
  }
  func.func @transform_1(%arg0: i32, %arg1: i32) -> (i32, i32, i32) {
    %c0_i32 = arith.constant 0 : i32
    %c0_i32_0 = arith.constant 0 : i32
    %c0_i32_1 = arith.constant 0 : i32
    return %arg1, %c0_i32, %c0_i32_0 : i32, i32, i32
  }
  func.func @transform_2(%arg0: i32, %arg1: i32) -> (i32, i32, i32) {
    %c0_i32 = arith.constant 0 : i32
    %c0_i32_0 = arith.constant 0 : i32
    %c0_i32_1 = arith.constant 0 : i32
    return %arg1, %c0_i32, %c0_i32_0 : i32, i32, i32
  }
  func.func @transform_3(%arg0: i32, %arg1: i32) -> (i32, i32, i32) {
    %c0_i32 = arith.constant 0 : i32
    %c0_i32_0 = arith.constant 0 : i32
    %c0_i32_1 = arith.constant 0 : i32
    return %arg1, %c0_i32, %c0_i32_0 : i32, i32, i32
  }
  func.func @transform_4(%arg0: i32, %arg1: i32) -> (i32, i32, i32) {
    %c0_i32 = arith.constant 0 : i32
    %c0_i32_0 = arith.constant 0 : i32
    %c0_i32_1 = arith.constant 0 : i32
    return %arg1, %c0_i32, %c0_i32_0 : i32, i32, i32
  }
  func.func @transform_5(%arg0: i32, %arg1: i32) -> (i32, i32, i32) {
    %c0_i32 = arith.constant 0 : i32
    %c0_i32_0 = arith.constant 0 : i32
    %c0_i32_1 = arith.constant 0 : i32
    return %arg1, %c0_i32, %c0_i32_0 : i32, i32, i32
  }
  func.func @transform_6(%arg0: i32, %arg1: i32) -> (i32, i32, i32) {
    %c0_i32 = arith.constant 0 : i32
    %c0_i32_0 = arith.constant 0 : i32
    %c0_i32_1 = arith.constant 0 : i32
    return %arg1, %c0_i32, %c0_i32_0 : i32, i32, i32
  }
  func.func @transform_7(%arg0: i32, %arg1: i32) -> (i32, i32, i32) {
    %c0_i32 = arith.constant 0 : i32
    %c0_i32_0 = arith.constant 0 : i32
    %c0_i32_1 = arith.constant 0 : i32
    return %arg1, %c0_i32, %c0_i32_0 : i32, i32, i32
  }
  func.func @transform_8(%arg0: i32, %arg1: i32) -> (i32, i32, i32) {
    %c0_i32 = arith.constant 0 : i32
    %c0_i32_0 = arith.constant 0 : i32
    %c0_i32_1 = arith.constant 0 : i32
    return %arg1, %c0_i32, %c0_i32_0 : i32, i32, i32
  }
  func.func @transform_9(%arg0: i32, %arg1: i32) -> (i32, i32, i32) {
    %c0_i32 = arith.constant 0 : i32
    %c0_i32_0 = arith.constant 0 : i32
    %c0_i32_1 = arith.constant 0 : i32
    return %arg1, %c0_i32, %c0_i32_0 : i32, i32, i32
  }
  func.func @transform_10(%arg0: i32, %arg1: i32) -> (i32, i32, i32) {
    %c0_i32 = arith.constant 0 : i32
    %c0_i32_0 = arith.constant 0 : i32
    %c0_i32_1 = arith.constant 0 : i32
    return %arg1, %c0_i32, %c0_i32_0 : i32, i32, i32
  }
  func.func @transform_11(%arg0: i32, %arg1: i32) -> (i32, i32, i32) {
    %c0_i32 = arith.constant 0 : i32
    %c0_i32_0 = arith.constant 0 : i32
    %c0_i32_1 = arith.constant 0 : i32
    return %arg1, %c0_i32, %c0_i32_0 : i32, i32, i32
  }
  func.func @transform_12(%arg0: i32, %arg1: i32) -> (i32, i32, i32) {
    %c0_i32 = arith.constant 0 : i32
    %c0_i32_0 = arith.constant 0 : i32
    %c0_i32_1 = arith.constant 0 : i32
    return %arg1, %c0_i32, %c0_i32_0 : i32, i32, i32
  }
  func.func @transform_13(%arg0: i32, %arg1: i32) -> (i32, i32, i32) {
    %c0_i32 = arith.constant 0 : i32
    %c0_i32_0 = arith.constant 0 : i32
    %c0_i32_1 = arith.constant 0 : i32
    return %arg0, %c0_i32, %c0_i32_0 : i32, i32, i32
  }
}

</mosaic_0001>

<llo_original>
// kernel: tpu_custom_call.1
$region0: #{tpu_custom_call.1}
  #allocation0 [shape = 'u32[]', space=smem, size = 0x4, offset = 0x4, fixed_abs, tag = 'smem constant byte address 0x4 - core index']
  #allocation1 [shape = 'u32[72,128]{1,0:T(1,128)}', space=vmem, size = 0x9000, scoped, tag = 'internal scratch']
  %s0 = inlined_call_operand.hbm [shape: f32[2,8,128], index: 0, kind: input, shape index: {}]
  %s1 = inlined_call_operand.hbm [shape: f32[2,1,128], index: 1, kind: input, shape index: {}]
  %s2 = inlined_call_operand.hbm [shape: f32[2,1,128], index: 2, kind: input, shape index: {}]
  %s3 = inlined_call_operand.hbm [shape: bf16[2,128,384], index: 3, kind: input, shape index: {}]
  %s4 = inlined_call_operand.hbm [shape: f32[2,1,384], index: 4, kind: input, shape index: {}]
  %s5 = inlined_call_operand.hbm [shape: bf16[2,128,128], index: 5, kind: input, shape index: {}]
  %s6 = inlined_call_operand.hbm [shape: f32[2,1,128], index: 6, kind: input, shape index: {}]
  %s7 = inlined_call_operand.hbm [shape: f32[2,1,128], index: 7, kind: input, shape index: {}]
  %s8 = inlined_call_operand.hbm [shape: f32[2,1,128], index: 8, kind: input, shape index: {}]
  %s9 = inlined_call_operand.hbm [shape: bf16[2,128,512], index: 9, kind: input, shape index: {}]
  %s10 = inlined_call_operand.vmem [shape: f32[2,1,512], index: 10, kind: input, shape index: {}]
  %s11 = inlined_call_operand.hbm [shape: bf16[2,512,128], index: 11, kind: input, shape index: {}]
  %s12 = inlined_call_operand.vmem [shape: f32[2,1,128], index: 12, kind: input, shape index: {}]
  %s13 = inlined_call_operand.hbm [shape: f32[2,8,128], index: 13, kind: output, shape index: {}]
  %s14 = sld [smem:[#allocation0]]
  $region133: #{tpu_custom_call.1} parent=0
    _
  %s16 = ssub.s32 1, %s14
  %s17 = scalar_select 0, %s16, %s14
  $region1: #{tpu_custom_call.1} parent=0
    #allocation2 [shape = 'u8[8192]{0}', space=vmem, size = 0x2000, scoped, tag = 'input window, operand 0']
    #allocation3 [shape = 's32[2]{0}', space=sflag, size = 0x8, scoped, tag = 'scoped memory for tpu_custom_call.1']
    #allocation4 [shape = 's32[2]{0}', space=sflag, size = 0x8, scoped, tag = 'scoped memory for tpu_custom_call.1']
    #allocation5 [shape = 'u8[1024]{0}', space=vmem, size = 0x400, scoped, tag = 'input window, operand 1']
    #allocation6 [shape = 's32[2]{0}', space=sflag, size = 0x8, scoped, tag = 'scoped memory for tpu_custom_call.1']
    #allocation7 [shape = 'u8[1024]{0}', space=vmem, size = 0x400, scoped, tag = 'input window, operand 2']
    #allocation8 [shape = 'u8[196608]{0}', space=vmem, size = 0x30000, scoped, tag = 'input window, operand 3']
    #allocation9 [shape = 's32[2]{0}', space=sflag, size = 0x8, scoped, tag = 'scoped memory for tpu_custom_call.1']
    #allocation10 [shape = 'u8[3072]{0}', space=vmem, size = 0xc00, scoped, tag = 'input window, operand 4']
    #allocation11 [shape = 'u8[65536]{0}', space=vmem, size = 0x10000, scoped, tag = 'input window, operand 5']
    #allocation12 [shape = 's32[2]{0}', space=sflag, size = 0x8, scoped, tag = 'scoped memory for tpu_custom_call.1']
    #allocation13 [shape = 'u8[1024]{0}', space=vmem, size = 0x400, scoped, tag = 'input window, operand 6']
    #allocation14 [shape = 'u8[1024]{0}', space=vmem, size = 0x400, scoped, tag = 'input window, operand 7']
    #allocation15 [shape = 's32[2]{0}', space=sflag, size = 0x8, scoped, tag = 'scoped memory for tpu_custom_call.1']
    #allocation16 [shape = 'u8[1024]{0}', space=vmem, size = 0x400, scoped, tag = 'input window, operand 8']
    #allocation17 [shape = 'u8[262144]{0}', space=vmem, size = 0x40000, scoped, tag = 'input window, operand 9']
    #allocation18 [shape = 's32[2]{0}', space=sflag, size = 0x8, scoped, tag = 'scoped memory for tpu_custom_call.1']
    #allocation19 [shape = 'u8[262144]{0}', space=vmem, size = 0x40000, scoped, tag = 'input window, operand 11']
    #allocation20 [shape = 'u8[8192]{0}', space=vmem, size = 0x2000, scoped, tag = 'output window, operand 0']
    %18 = vsyncpa [#allocation3], 0
    %s19 = scalar_lea.sflag [#allocation3], 1
    %20 = vsyncpa %s19, 0
    %21 = vsyncpa [#allocation6], 0
    %s22 = scalar_lea.sflag [#allocation6], 1
    %23 = vsyncpa %s22, 0
    %24 = vsyncpa [#allocation9], 0
    %s25 = scalar_lea.sflag [#allocation9], 1
    %26 = vsyncpa %s25, 0
    %27 = vsyncpa [#allocation12], 0
    %s28 = scalar_lea.sflag [#allocation12], 1
    %29 = vsyncpa %s28, 0
    %30 = vsyncpa [#allocation15], 0
    %s31 = scalar_lea.sflag [#allocation15], 1
    %32 = vsyncpa %s31, 0
    %33 = vsyncpa [#allocation18], 0
    %s34 = scalar_lea.sflag [#allocation18], 1
    %35 = vsyncpa %s34, 0
    %36 = vsyncpa [#allocation4], 0
    %s37 = scalar_lea.sflag [#allocation4], 1
    %38 = vsyncpa %s37, 0
    loop: start=0, step=1, limit=6
    $region2: #{tpu_custom_call.1} parent=1 // loop_pre_header
      _
    $region3: #{tpu_custom_call.1} parent=1 // loop_header
      %s40 = sphi 0, %s44
      %p41 = scmp.ge.s32.totalorder %s40, 6
      %s47 = sphi 0, %s59
      %s48 = sphi 0, %s55
      %s49 = sphi 0, %s47
      %s50 = sphi 0, %s48
      %s51 = sphi 0, %s49
      %s52 = sphi 0, %s50
      %s62 = sphi 0, %s64
      %s65 = sphi 0, %s62
      %s66 = sphi 0, %s65
      %s82 = sphi 0, %s66
      %s88 = sphi 0, %s90
      %s91 = sphi 0, %s88
      %s92 = sphi 0, %s91
      %s108 = sphi 0, %s92
      %s114 = sphi 0, %s116
      %s117 = sphi 0, %s114
      %s118 = sphi 0, %s117
      %s134 = sphi 0, %s118
      %s140 = sphi 0, %s142
      %s143 = sphi 0, %s140
      %s144 = sphi 0, %s143
      %s160 = sphi 0, %s144
      %s166 = sphi 0, %s168
      %s169 = sphi 0, %s166
      %s170 = sphi 0, %s169
      %s186 = sphi 0, %s170
      %s192 = sphi 0, %s194
      %s195 = sphi 0, %s192
      %s196 = sphi 0, %s195
      %s212 = sphi 0, %s196
      %s218 = sphi 0, %s220
      %s221 = sphi 0, %s218
      %s222 = sphi 0, %s221
      %s238 = sphi 0, %s222
      %s244 = sphi 0, %s246
      %s247 = sphi 0, %s244
      %s248 = sphi 0, %s247
      %s264 = sphi 0, %s248
      %s270 = sphi 0, %s272
      %s273 = sphi 0, %s270
      %s274 = sphi 0, %s273
      %s290 = sphi 0, %s274
      %s296 = sphi 0, %s298
      %s299 = sphi 0, %s296
      %s300 = sphi 0, %s299
      %s316 = sphi 0, %s300
      %s322 = sphi 0, %s324
      %s325 = sphi 0, %s322
      %s326 = sphi 0, %s325
      %s342 = sphi 0, %s326
      %s348 = sphi 0, %s350
      %s351 = sphi 0, %s348
      %s352 = sphi 0, %s351
      %s368 = sphi 0, %s352
      %s374 = sphi 0, %s376
      %s377 = sphi 0, %s374
      %s378 = sphi 0, %s377
      %s394 = sphi 0, %s378
      %s400 = sphi 0, %s402
      %s403 = sphi 0, %s400
      %s404 = sphi 0, %s403
      %s420 = sphi 0, %s404
    $region4: #{tpu_custom_call.1} parent=1 // loop_header_branch
      %43 = sbr.rel (%p41) target = $region8
    $region5: #{tpu_custom_call.1} parent=1 // loop_body
      %s45 = ssub.s32 %s40, 1
      %s46 = ssub.s32 %s40, 2
      %s53 = sadd.s32 1, %s48
      %p54 = scmp.ge.s32.totalorder %s53, 2
      %s55 = scalar_select %p54, 0, %s53
      %s56 = sadd.s32 1, %s47
      %s57 = scalar_select %p54, %s56, %s47
      %p58 = scmp.ge.s32.totalorder %s57, 2
      %s59 = scalar_select %p58, 0, %s57
      %s60 = ssub.s32 %s47, %s59
      %p61 = scmp.eq.s32.totalorder %s60, 0
      %s63 = sadd.s32 %s62, 1
      %s64 = scalar_select %p61, %s62, %s63
      %p67 = pneg %p61
      %p68 = scmp.eq.s32.totalorder %s40, 3
      %p69 = por %p67, %p68
      %p70 = scmp.ne.s32.totalorder %s62, %s65
      %p71 = scmp.eq.s32.totalorder %s40, 0
      %p72 = por %p70, %p71
      %p73 = scmp.ne.s32.totalorder %s62, %s65
      %p74 = scmp.eq.s32.totalorder %s45, 3
      %p75 = por %p73, %p74
      %p76 = scmp.ne.s32.totalorder %s65, %s66
      %p77 = scmp.eq.s32.totalorder %s45, 0
      %p78 = por %p76, %p77
      %p79 = scmp.ne.s32.totalorder %s65, %s66
      %p80 = scmp.eq.s32.totalorder %s46, 3
      %p81 = por %p79, %p80
      %p83 = scmp.ne.s32.totalorder %s66, %s82
      %p84 = scmp.eq.s32.totalorder %s46, 0
      %p85 = por %p83, %p84
      %s86 = ssub.s32 %s48, %s55
      %p87 = scmp.eq.s32.totalorder %s86, 0
      %s89 = sadd.s32 %s88, 1
      %s90 = scalar_select %p87, %s88, %s89
      %p93 = pneg %p87
      %p94 = scmp.eq.s32.totalorder %s40, 3
      %p95 = por %p93, %p94
      %p96 = scmp.ne.s32.totalorder %s88, %s91
      %p97 = scmp.eq.s32.totalorder %s40, 0
      %p98 = por %p96, %p97
      %p99 = scmp.ne.s32.totalorder %s88, %s91
      %p100 = scmp.eq.s32.totalorder %s45, 3
      %p101 = por %p99, %p100
      %p102 = scmp.ne.s32.totalorder %s91, %s92
      %p103 = scmp.eq.s32.totalorder %s45, 0
      %p104 = por %p102, %p103
      %p105 = scmp.ne.s32.totalorder %s91, %s92
      %p106 = scmp.eq.s32.totalorder %s46, 3
      %p107 = por %p105, %p106
      %p109 = scmp.ne.s32.totalorder %s92, %s108
      %p110 = scmp.eq.s32.totalorder %s46, 0
      %p111 = por %p109, %p110
      %s112 = ssub.s32 %s48, %s55
      %p113 = scmp.eq.s32.totalorder %s112, 0
      %s115 = sadd.s32 %s114, 1
      %s116 = scalar_select %p113, %s114, %s115
      %p119 = pneg %p113
      %p120 = scmp.eq.s32.totalorder %s40, 3
      %p121 = por %p119, %p120
      %p122 = scmp.ne.s32.totalorder %s114, %s117
      %p123 = scmp.eq.s32.totalorder %s40, 0
      %p124 = por %p122, %p123
      %p125 = scmp.ne.s32.totalorder %s114, %s117
      %p126 = scmp.eq.s32.totalorder %s45, 3
      %p127 = por %p125, %p126
      %p128 = scmp.ne.s32.totalorder %s117, %s118
      %p129 = scmp.eq.s32.totalorder %s45, 0
      %p130 = por %p128, %p129
      %p131 = scmp.ne.s32.totalorder %s117, %s118
      %p132 = scmp.eq.s32.totalorder %s46, 3
      %p133 = por %p131, %p132
      %p135 = scmp.ne.s32.totalorder %s118, %s134
      %p136 = scmp.eq.s32.totalorder %s46, 0
      %p137 = por %p135, %p136
      %s138 = ssub.s32 %s48, %s55
      %p139 = scmp.eq.s32.totalorder %s138, 0
      %s141 = sadd.s32 %s140, 1
      %s142 = scalar_select %p139, %s140, %s141
      %p145 = pneg %p139
      %p146 = scmp.eq.s32.totalorder %s40, 3
      %p147 = por %p145, %p146
      %p148 = scmp.ne.s32.totalorder %s140, %s143
      %p149 = scmp.eq.s32.totalorder %s40, 0
      %p150 = por %p148, %p149
      %p151 = scmp.ne.s32.totalorder %s140, %s143
      %p152 = scmp.eq.s32.totalorder %s45, 3
      %p153 = por %p151, %p152
      %p154 = scmp.ne.s32.totalorder %s143, %s144
      %p155 = scmp.eq.s32.totalorder %s45, 0
      %p156 = por %p154, %p155
      %p157 = scmp.ne.s32.totalorder %s143, %s144
      %p158 = scmp.eq.s32.totalorder %s46, 3
      %p159 = por %p157, %p158
      %p161 = scmp.ne.s32.totalorder %s144, %s160
      %p162 = scmp.eq.s32.totalorder %s46, 0
      %p163 = por %p161, %p162
      %s164 = ssub.s32 %s48, %s55
      %p165 = scmp.eq.s32.totalorder %s164, 0
      %s167 = sadd.s32 %s166, 1
      %s168 = scalar_select %p165, %s166, %s167
      %p171 = pneg %p165
      %p172 = scmp.eq.s32.totalorder %s40, 3
      %p173 = por %p171, %p172
      %p174 = scmp.ne.s32.totalorder %s166, %s169
      %p175 = scmp.eq.s32.totalorder %s40, 0
      %p176 = por %p174, %p175
      %p177 = scmp.ne.s32.totalorder %s166, %s169
      %p178 = scmp.eq.s32.totalorder %s45, 3
      %p179 = por %p177, %p178
      %p180 = scmp.ne.s32.totalorder %s169, %s170
      %p181 = scmp.eq.s32.totalorder %s45, 0
      %p182 = por %p180, %p181
      %p183 = scmp.ne.s32.totalorder %s169, %s170
      %p184 = scmp.eq.s32.totalorder %s46, 3
      %p185 = por %p183, %p184
      %p187 = scmp.ne.s32.totalorder %s170, %s186
      %p188 = scmp.eq.s32.totalorder %s46, 0
      %p189 = por %p187, %p188
      %s190 = ssub.s32 %s48, %s55
      %p191 = scmp.eq.s32.totalorder %s190, 0
      %s193 = sadd.s32 %s192, 1
      %s194 = scalar_select %p191, %s192, %s193
      %p197 = pneg %p191
      %p198 = scmp.eq.s32.totalorder %s40, 3
      %p199 = por %p197, %p198
      %p200 = scmp.ne.s32.totalorder %s192, %s195
      %p201 = scmp.eq.s32.totalorder %s40, 0
      %p202 = por %p200, %p201
      %p203 = scmp.ne.s32.totalorder %s192, %s195
      %p204 = scmp.eq.s32.totalorder %s45, 3
      %p205 = por %p203, %p204
      %p206 = scmp.ne.s32.totalorder %s195, %s196
      %p207 = scmp.eq.s32.totalorder %s45, 0
      %p208 = por %p206, %p207
      %p209 = scmp.ne.s32.totalorder %s195, %s196
      %p210 = scmp.eq.s32.totalorder %s46, 3
      %p211 = por %p209, %p210
      %p213 = scmp.ne.s32.totalorder %s196, %s212
      %p214 = scmp.eq.s32.totalorder %s46, 0
      %p215 = por %p213, %p214
      %s216 = ssub.s32 %s48, %s55
      %p217 = scmp.eq.s32.totalorder %s216, 0
      %s219 = sadd.s32 %s218, 1
      %s220 = scalar_select %p217, %s218, %s219
      %p223 = pneg %p217
      %p224 = scmp.eq.s32.totalorder %s40, 3
      %p225 = por %p223, %p224
      %p226 = scmp.ne.s32.totalorder %s218, %s221
      %p227 = scmp.eq.s32.totalorder %s40, 0
      %p228 = por %p226, %p227
      %p229 = scmp.ne.s32.totalorder %s218, %s221
      %p230 = scmp.eq.s32.totalorder %s45, 3
      %p231 = por %p229, %p230
      %p232 = scmp.ne.s32.totalorder %s221, %s222
      %p233 = scmp.eq.s32.totalorder %s45, 0
      %p234 = por %p232, %p233
      %p235 = scmp.ne.s32.totalorder %s221, %s222
      %p236 = scmp.eq.s32.totalorder %s46, 3
      %p237 = por %p235, %p236
      %p239 = scmp.ne.s32.totalorder %s222, %s238
      %p240 = scmp.eq.s32.totalorder %s46, 0
      %p241 = por %p239, %p240
      %s242 = ssub.s32 %s48, %s55
      %p243 = scmp.eq.s32.totalorder %s242, 0
      %s245 = sadd.s32 %s244, 1
      %s246 = scalar_select %p243, %s244, %s245
      %p249 = pneg %p243
      %p250 = scmp.eq.s32.totalorder %s40, 3
      %p251 = por %p249, %p250
      %p252 = scmp.ne.s32.totalorder %s244, %s247
      %p253 = scmp.eq.s32.totalorder %s40, 0
      %p254 = por %p252, %p253
      %p255 = scmp.ne.s32.totalorder %s244, %s247
      %p256 = scmp.eq.s32.totalorder %s45, 3
      %p257 = por %p255, %p256
      %p258 = scmp.ne.s32.totalorder %s247, %s248
      %p259 = scmp.eq.s32.totalorder %s45, 0
      %p260 = por %p258, %p259
      %p261 = scmp.ne.s32.totalorder %s247, %s248
      %p262 = scmp.eq.s32.totalorder %s46, 3
      %p263 = por %p261, %p262
      %p265 = scmp.ne.s32.totalorder %s248, %s264
      %p266 = scmp.eq.s32.totalorder %s46, 0
      %p267 = por %p265, %p266
      %s268 = ssub.s32 %s48, %s55
      %p269 = scmp.eq.s32.totalorder %s268, 0
      %s271 = sadd.s32 %s270, 1
      %s272 = scalar_select %p269, %s270, %s271
      %p275 = pneg %p269
      %p276 = scmp.eq.s32.totalorder %s40, 3
      %p277 = por %p275, %p276
      %p278 = scmp.ne.s32.totalorder %s270, %s273
      %p279 = scmp.eq.s32.totalorder %s40, 0
      %p280 = por %p278, %p279
      %p281 = scmp.ne.s32.totalorder %s270, %s273
      %p282 = scmp.eq.s32.totalorder %s45, 3
      %p283 = por %p281, %p282
      %p284 = scmp.ne.s32.totalorder %s273, %s274
      %p285 = scmp.eq.s32.totalorder %s45, 0
      %p286 = por %p284, %p285
      %p287 = scmp.ne.s32.totalorder %s273, %s274
      %p288 = scmp.eq.s32.totalorder %s46, 3
      %p289 = por %p287, %p288
      %p291 = scmp.ne.s32.totalorder %s274, %s290
      %p292 = scmp.eq.s32.totalorder %s46, 0
      %p293 = por %p291, %p292
      %s294 = ssub.s32 %s48, %s55
      %p295 = scmp.eq.s32.totalorder %s294, 0
      %s297 = sadd.s32 %s296, 1
      %s298 = scalar_select %p295, %s296, %s297
      %p301 = pneg %p295
      %p302 = scmp.eq.s32.totalorder %s40, 3
      %p303 = por %p301, %p302
      %p304 = scmp.ne.s32.totalorder %s296, %s299
      %p305 = scmp.eq.s32.totalorder %s40, 0
      %p306 = por %p304, %p305
      %p307 = scmp.ne.s32.totalorder %s296, %s299
      %p308 = scmp.eq.s32.totalorder %s45, 3
      %p309 = por %p307, %p308
      %p310 = scmp.ne.s32.totalorder %s299, %s300
      %p311 = scmp.eq.s32.totalorder %s45, 0
      %p312 = por %p310, %p311
      %p313 = scmp.ne.s32.totalorder %s299, %s300
      %p314 = scmp.eq.s32.totalorder %s46, 3
      %p315 = por %p313, %p314
      %p317 = scmp.ne.s32.totalorder %s300, %s316
      %p318 = scmp.eq.s32.totalorder %s46, 0
      %p319 = por %p317, %p318
      %s320 = ssub.s32 %s48, %s55
      %p321 = scmp.eq.s32.totalorder %s320, 0
      %s323 = sadd.s32 %s322, 1
      %s324 = scalar_select %p321, %s322, %s323
      %p327 = pneg %p321
      %p328 = scmp.eq.s32.totalorder %s40, 3
      %p329 = por %p327, %p328
      %p330 = scmp.ne.s32.totalorder %s322, %s325
      %p331 = scmp.eq.s32.totalorder %s40, 0
      %p332 = por %p330, %p331
      %p333 = scmp.ne.s32.totalorder %s322, %s325
      %p334 = scmp.eq.s32.totalorder %s45, 3
      %p335 = por %p333, %p334
      %p336 = scmp.ne.s32.totalorder %s325, %s326
      %p337 = scmp.eq.s32.totalorder %s45, 0
      %p338 = por %p336, %p337
      %p339 = scmp.ne.s32.totalorder %s325, %s326
      %p340 = scmp.eq.s32.totalorder %s46, 3
      %p341 = por %p339, %p340
      %p343 = scmp.ne.s32.totalorder %s326, %s342
      %p344 = scmp.eq.s32.totalorder %s46, 0
      %p345 = por %p343, %p344
      %s346 = ssub.s32 %s48, %s55
      %p347 = scmp.eq.s32.totalorder %s346, 0
      %s349 = sadd.s32 %s348, 1
      %s350 = scalar_select %p347, %s348, %s349
      %p353 = pneg %p347
      %p354 = scmp.eq.s32.totalorder %s40, 3
      %p355 = por %p353, %p354
      %p356 = scmp.ne.s32.totalorder %s348, %s351
      %p357 = scmp.eq.s32.totalorder %s40, 0
      %p358 = por %p356, %p357
      %p359 = scmp.ne.s32.totalorder %s348, %s351
      %p360 = scmp.eq.s32.totalorder %s45, 3
      %p361 = por %p359, %p360
      %p362 = scmp.ne.s32.totalorder %s351, %s352
      %p363 = scmp.eq.s32.totalorder %s45, 0
      %p364 = por %p362, %p363
      %p365 = scmp.ne.s32.totalorder %s351, %s352
      %p366 = scmp.eq.s32.totalorder %s46, 3
      %p367 = por %p365, %p366
      %p369 = scmp.ne.s32.totalorder %s352, %s368
      %p370 = scmp.eq.s32.totalorder %s46, 0
      %p371 = por %p369, %p370
      %s372 = ssub.s32 %s48, %s55
      %p373 = scmp.eq.s32.totalorder %s372, 0
      %s375 = sadd.s32 %s374, 1
      %s376 = scalar_select %p373, %s374, %s375
      %p379 = pneg %p373
      %p380 = scmp.eq.s32.totalorder %s40, 3
      %p381 = por %p379, %p380
      %p382 = scmp.ne.s32.totalorder %s374, %s377
      %p383 = scmp.eq.s32.totalorder %s40, 0
      %p384 = por %p382, %p383
      %p385 = scmp.ne.s32.totalorder %s374, %s377
      %p386 = scmp.eq.s32.totalorder %s45, 3
      %p387 = por %p385, %p386
      %p388 = scmp.ne.s32.totalorder %s377, %s378
      %p389 = scmp.eq.s32.totalorder %s45, 0
      %p390 = por %p388, %p389
      %p391 = scmp.ne.s32.totalorder %s377, %s378
      %p392 = scmp.eq.s32.totalorder %s46, 3
      %p393 = por %p391, %p392
      %p395 = scmp.ne.s32.totalorder %s378, %s394
      %p396 = scmp.eq.s32.totalorder %s46, 0
      %p397 = por %p395, %p396
      %s398 = ssub.s32 %s47, %s59
      %p399 = scmp.eq.s32.totalorder %s398, 0
      %s401 = sadd.s32 %s400, 1
      %s402 = scalar_select %p399, %s400, %s401
      %p405 = pneg %p399
      %p406 = scmp.eq.s32.totalorder %s40, 3
      %p407 = por %p405, %p406
      %p408 = scmp.ne.s32.totalorder %s400, %s403
      %p409 = scmp.eq.s32.totalorder %s40, 0
      %p410 = por %p408, %p409
      %p411 = scmp.ne.s32.totalorder %s400, %s403
      %p412 = scmp.eq.s32.totalorder %s45, 3
      %p413 = por %p411, %p412
      %p414 = scmp.ne.s32.totalorder %s403, %s404
      %p415 = scmp.eq.s32.totalorder %s45, 0
      %p416 = por %p414, %p415
      %p417 = scmp.ne.s32.totalorder %s403, %s404
      %p418 = scmp.eq.s32.totalorder %s46, 3
      %p419 = por %p417, %p418
      %p421 = scmp.ne.s32.totalorder %s404, %s420
      %p422 = scmp.eq.s32.totalorder %s46, 0
      %p423 = por %p421, %p422
      %p424 = scmp.le.s32.totalorder 1, %s40
      %p425 = scmp.lt.s32.totalorder %s40, 5
      %p426 = pnand %p424, %p425
      %p427 = pneg %p426
      // Predicated region
      $region9: #{tpu_custom_call.1} parent=5 // pred_check
        _
      $region10: #{tpu_custom_call.1} parent=5 // pred_check_branch
        %429 = sbr.rel (%p426) target = $region12
      $region11: #{tpu_custom_call.1} parent=5 // pred_region
        %s430 = ssub.s32 %s40, 1
      $region12: #{tpu_custom_call.1} parent=5 // pred_fallthru
        _
      %p431 = scmp.lt.s32.totalorder %s40, 4
      // Predicated region
      $region13: #{tpu_custom_call.1} parent=5 // pred_check
        %p432 = pneg %p431
      $region14: #{tpu_custom_call.1} parent=5 // pred_check_branch
        %434 = sbr.rel (%p432) target = $region16
      $region15: #{tpu_custom_call.1} parent=5 // pred_region
        // Predicated region
        $region17: #{tpu_custom_call.1} parent=15 // pred_check
          %p435 = pneg %p72
        $region18: #{tpu_custom_call.1} parent=15 // pred_check_branch
          %437 = sbr.rel (%p435) target = $region20
        $region19: #{tpu_custom_call.1} parent=15 // pred_region
          %s438 = sand.u32 %s62, 1
          %s439 = scalar_lea.sflag [#allocation3], %s438
          %s440 = sand.u32 %s62, 1
          %s441 = smul.addr %s440, 8
          %s442 = scalar_lea.vmem [#allocation2], %s441
          %444 = vsyncadd %s439, 0
          %s445 = smul.addr %s47, 8
          %s446 = scalar_lea.hbm %s0, %s445
          %s448 = sshll.u32 %s446, 4
          %s449 = int_to_ptr.hbm [resolvable:$true] %s448
          %s450 = sshll.u32 %s442, 4
          %s451 = int_to_ptr.vmem [resolvable:$true] %s450
          %453 = dma.hbm_to_vmem [thread:$0]  %s449, 128, %s451, %s439
        $region20: #{tpu_custom_call.1} parent=15 // pred_fallthru
          _
        // Predicated region
        $region21: #{tpu_custom_call.1} parent=15 // pred_check
          %p454 = pneg %p98
        $region22: #{tpu_custom_call.1} parent=15 // pred_check_branch
          %456 = sbr.rel (%p454) target = $region24
        $region23: #{tpu_custom_call.1} parent=15 // pred_region
          %s457 = sand.u32 %s40, 1
          %s458 = scalar_lea.sflag [#allocation6], %s457
          %s459 = sand.u32 %s88, 1
          %s460 = scalar_lea.vmem [#allocation5], %s459
          %462 = vsyncadd %s458, 0
          %s463 = scalar_lea.hbm %s1, %s48
          %s465 = sshll.u32 %s463, 4
          %s466 = int_to_ptr.hbm [resolvable:$true] %s465
          %s467 = sshll.u32 %s460, 4
          %s468 = int_to_ptr.vmem [resolvable:$true] %s467
          %470 = dma.hbm_to_vmem [thread:$0]  %s466, 16, %s468, %s458
        $region24: #{tpu_custom_call.1} parent=15 // pred_fallthru
          _
        // Predicated region
        $region25: #{tpu_custom_call.1} parent=15 // pred_check
          %p471 = pneg %p124
        $region26: #{tpu_custom_call.1} parent=15 // pred_check_branch
          %473 = sbr.rel (%p471) target = $region28
        $region27: #{tpu_custom_call.1} parent=15 // pred_region
          %s474 = sand.u32 %s40, 1
          %s475 = scalar_lea.sflag [#allocation6], %s474
          %s476 = sand.u32 %s114, 1
          %s477 = scalar_lea.vmem [#allocation7], %s476
          %479 = vsyncadd %s475, 0
          %s480 = scalar_lea.hbm %s2, %s48
          %s482 = sshll.u32 %s480, 4
          %s483 = int_to_ptr.hbm [resolvable:$true] %s482
          %s484 = sshll.u32 %s477, 4
          %s485 = int_to_ptr.vmem [resolvable:$true] %s484
          %487 = dma.hbm_to_vmem [thread:$0]  %s483, 16, %s485, %s475
        $region28: #{tpu_custom_call.1} parent=15 // pred_fallthru
          _
        // Predicated region
        $region29: #{tpu_custom_call.1} parent=15 // pred_check
          %p488 = pneg %p150
        $region30: #{tpu_custom_call.1} parent=15 // pred_check_branch
          %490 = sbr.rel (%p488) target = $region32
        $region31: #{tpu_custom_call.1} parent=15 // pred_region
          %s491 = sand.u32 %s40, 1
          %s492 = scalar_lea.sflag [#allocation9], %s491
          %s493 = sand.u32 %s140, 1
          %s494 = smul.addr %s493, 192
          %s495 = scalar_lea.vmem [#allocation8], %s494
          %497 = vsyncadd %s492, 0
          %s498 = smul.addr %s48, 48
          %s499 = smul.addr %s498, 4
          %s500 = scalar_lea.hbm %s3, %s499
          %s501 = sshll.u32 %s500, 4
          %s502 = int_to_ptr.hbm [resolvable:$true] %s501
          %s503 = sshll.u32 %s495, 4
          %s504 = int_to_ptr.vmem [resolvable:$true] %s503
          %509 = dma.hbm_to_vmem [thread:$0]  %s502, 3072, %s504, %s492, 192, 192, 12
        $region32: #{tpu_custom_call.1} parent=15 // pred_fallthru
          _
        // Predicated region
        $region33: #{tpu_custom_call.1} parent=15 // pred_check
          %p510 = pneg %p176
        $region34: #{tpu_custom_call.1} parent=15 // pred_check_branch
          %512 = sbr.rel (%p510) target = $region36
        $region35: #{tpu_custom_call.1} parent=15 // pred_region
          %s513 = sand.u32 %s40, 1
          %s514 = scalar_lea.sflag [#allocation9], %s513
          %s515 = sand.u32 %s166, 1
          %s516 = smul.addr %s515, 3
          %s517 = scalar_lea.vmem [#allocation10], %s516
          %519 = vsyncadd %s514, 0
          %s520 = smul.addr %s48, 3
          %s521 = scalar_lea.hbm %s4, %s520
          %s523 = sshll.u32 %s521, 4
          %s524 = int_to_ptr.hbm [resolvable:$true] %s523
          %s525 = sshll.u32 %s517, 4
          %s526 = int_to_ptr.vmem [resolvable:$true] %s525
          %528 = dma.hbm_to_vmem [thread:$0]  %s524, 48, %s526, %s514
        $region36: #{tpu_custom_call.1} parent=15 // pred_fallthru
          _
        // Predicated region
        $region37: #{tpu_custom_call.1} parent=15 // pred_check
          %p529 = pneg %p202
        $region38: #{tpu_custom_call.1} parent=15 // pred_check_branch
          %531 = sbr.rel (%p529) target = $region40
        $region39: #{tpu_custom_call.1} parent=15 // pred_region
          %s532 = sand.u32 %s40, 1
          %s533 = scalar_lea.sflag [#allocation12], %s532
          %s534 = sand.u32 %s192, 1
          %s535 = smul.addr %s534, 64
          %s536 = scalar_lea.vmem [#allocation11], %s535
          %538 = vsyncadd %s533, 0
          %s539 = smul.addr %s48, 16
          %s540 = smul.addr %s539, 4
          %s541 = scalar_lea.hbm %s5, %s540
          %s542 = sshll.u32 %s541, 4
          %s543 = int_to_ptr.hbm [resolvable:$true] %s542
          %s544 = sshll.u32 %s536, 4
          %s545 = int_to_ptr.vmem [resolvable:$true] %s544
          %550 = dma.hbm_to_vmem [thread:$0]  %s543, 1024, %s545, %s533, 64, 64, 4
        $region40: #{tpu_custom_call.1} parent=15 // pred_fallthru
          _
        // Predicated region
        $region41: #{tpu_custom_call.1} parent=15 // pred_check
          %p551 = pneg %p228
        $region42: #{tpu_custom_call.1} parent=15 // pred_check_branch
          %553 = sbr.rel (%p551) target = $region44
        $region43: #{tpu_custom_call.1} parent=15 // pred_region
          %s554 = sand.u32 %s40, 1
          %s555 = scalar_lea.sflag [#allocation12], %s554
          %s556 = sand.u32 %s218, 1
          %s557 = scalar_lea.vmem [#allocation13], %s556
          %559 = vsyncadd %s555, 0
          %s560 = scalar_lea.hbm %s6, %s48
          %s562 = sshll.u32 %s560, 4
          %s563 = int_to_ptr.hbm [resolvable:$true] %s562
          %s564 = sshll.u32 %s557, 4
          %s565 = int_to_ptr.vmem [resolvable:$true] %s564
          %567 = dma.hbm_to_vmem [thread:$0]  %s563, 16, %s565, %s555
        $region44: #{tpu_custom_call.1} parent=15 // pred_fallthru
          _
        // Predicated region
        $region45: #{tpu_custom_call.1} parent=15 // pred_check
          %p568 = pneg %p254
        $region46: #{tpu_custom_call.1} parent=15 // pred_check_branch
          %570 = sbr.rel (%p568) target = $region48
        $region47: #{tpu_custom_call.1} parent=15 // pred_region
          %s571 = sand.u32 %s40, 1
          %s572 = scalar_lea.sflag [#allocation15], %s571
          %s573 = sand.u32 %s244, 1
          %s574 = scalar_lea.vmem [#allocation14], %s573
          %576 = vsyncadd %s572, 0
          %s577 = scalar_lea.hbm %s7, %s48
          %s579 = sshll.u32 %s577, 4
          %s580 = int_to_ptr.hbm [resolvable:$true] %s579
          %s581 = sshll.u32 %s574, 4
          %s582 = int_to_ptr.vmem [resolvable:$true] %s581
          %584 = dma.hbm_to_vmem [thread:$0]  %s580, 16, %s582, %s572
        $region48: #{tpu_custom_call.1} parent=15 // pred_fallthru
          _
        // Predicated region
        $region49: #{tpu_custom_call.1} parent=15 // pred_check
          %p585 = pneg %p280
        $region50: #{tpu_custom_call.1} parent=15 // pred_check_branch
          %587 = sbr.rel (%p585) target = $region52
        $region51: #{tpu_custom_call.1} parent=15 // pred_region
          %s588 = sand.u32 %s40, 1
          %s589 = scalar_lea.sflag [#allocation15], %s588
          %s590 = sand.u32 %s270, 1
          %s591 = scalar_lea.vmem [#allocation16], %s590
          %593 = vsyncadd %s589, 0
          %s594 = scalar_lea.hbm %s8, %s48
          %s596 = sshll.u32 %s594, 4
          %s597 = int_to_ptr.hbm [resolvable:$true] %s596
          %s598 = sshll.u32 %s591, 4
          %s599 = int_to_ptr.vmem [resolvable:$true] %s598
          %601 = dma.hbm_to_vmem [thread:$0]  %s597, 16, %s599, %s589
        $region52: #{tpu_custom_call.1} parent=15 // pred_fallthru
          _
        // Predicated region
        $region53: #{tpu_custom_call.1} parent=15 // pred_check
          %p602 = pneg %p306
        $region54: #{tpu_custom_call.1} parent=15 // pred_check_branch
          %604 = sbr.rel (%p602) target = $region56
        $region55: #{tpu_custom_call.1} parent=15 // pred_region
          %s605 = sand.u32 %s40, 1
          %s606 = scalar_lea.sflag [#allocation18], %s605
          %s607 = sand.u32 %s296, 1
          %s608 = smul.addr %s607, 256
          %s609 = scalar_lea.vmem [#allocation17], %s608
          %611 = vsyncadd %s606, 0
          %s612 = smul.addr %s48, 64
          %s613 = smul.addr %s612, 4
          %s614 = scalar_lea.hbm %s9, %s613
          %s615 = sshll.u32 %s614, 4
          %s616 = int_to_ptr.hbm [resolvable:$true] %s615
          %s617 = sshll.u32 %s609, 4
          %s618 = int_to_ptr.vmem [resolvable:$true] %s617
          %623 = dma.hbm_to_vmem [thread:$0]  %s616, 4096, %s618, %s606, 256, 256, 16
        $region56: #{tpu_custom_call.1} parent=15 // pred_fallthru
          _
        // Predicated region
        $region57: #{tpu_custom_call.1} parent=15 // pred_check
          %p624 = pneg %p332
        $region58: #{tpu_custom_call.1} parent=15 // pred_check_branch
          %626 = sbr.rel (%p624) target = $region60
        $region59: #{tpu_custom_call.1} parent=15 // pred_region
          %p627 = scmp.lt.s32.totalorder %s48, 1
          %s628 = scalar_select %p627, %s48, 1
          %s629 = smul.addr %s628, 4
          %s630 = scalar_lea.vmem %s10, %s629
        $region60: #{tpu_custom_call.1} parent=15 // pred_fallthru
          _
        // Predicated region
        $region61: #{tpu_custom_call.1} parent=15 // pred_check
          %p631 = pneg %p358
        $region62: #{tpu_custom_call.1} parent=15 // pred_check_branch
          %633 = sbr.rel (%p631) target = $region64
        $region63: #{tpu_custom_call.1} parent=15 // pred_region
          %s634 = sand.u32 %s40, 1
          %s635 = scalar_lea.sflag [#allocation18], %s634
          %s636 = sand.u32 %s348, 1
          %s637 = smul.addr %s636, 256
          %s638 = scalar_lea.vmem [#allocation19], %s637
          %640 = vsyncadd %s635, 0
          %s641 = smul.addr %s48, 64
          %s642 = smul.addr %s641, 4
          %s643 = scalar_lea.hbm %s11, %s642
          %s644 = sshll.u32 %s643, 4
          %s645 = int_to_ptr.hbm [resolvable:$true] %s644
          %s646 = sshll.u32 %s638, 4
          %s647 = int_to_ptr.vmem [resolvable:$true] %s646
          %652 = dma.hbm_to_vmem [thread:$0]  %s645, 4096, %s647, %s635, 64, 64, 4
        $region64: #{tpu_custom_call.1} parent=15 // pred_fallthru
          _
        // Predicated region
        $region65: #{tpu_custom_call.1} parent=15 // pred_check
          %p653 = pneg %p384
        $region66: #{tpu_custom_call.1} parent=15 // pred_check_branch
          %655 = sbr.rel (%p653) target = $region68
        $region67: #{tpu_custom_call.1} parent=15 // pred_region
          %p656 = scmp.lt.s32.totalorder %s48, 1
          %s657 = scalar_select %p656, %s48, 1
          %s658 = scalar_lea.vmem %s12, %s657
        $region68: #{tpu_custom_call.1} parent=15 // pred_fallthru
          _
      $region16: #{tpu_custom_call.1} parent=5 // pred_fallthru
        _
      %p659 = scmp.le.s32.totalorder 1, %s40
      %p660 = scmp.lt.s32.totalorder %s40, 5
      %p661 = pnand %p659, %p660
      %p662 = pneg %p661
      // Predicated region
      $region69: #{tpu_custom_call.1} parent=5 // pred_check
        _
      $region70: #{tpu_custom_call.1} parent=5 // pred_check_branch
        %664 = sbr.rel (%p661) target = $region72
      $region71: #{tpu_custom_call.1} parent=5 // pred_region
        %s665 = ssub.s32 %s40, 1
        %s666 = sand.u32 %s65, 1
        %s667 = scalar_lea.sflag [#allocation3], %s666
        %s668 = sand.u32 %s65, 1
        %s669 = smul.addr %s668, 8
        %s670 = scalar_lea.vmem [#allocation2], %s669
        // Predicated region
        $region73: #{tpu_custom_call.1} parent=71 // pred_check
          %p671 = pneg %p78
        $region74: #{tpu_custom_call.1} parent=71 // pred_check_branch
          %673 = sbr.rel (%p671) target = $region76
        $region75: #{tpu_custom_call.1} parent=71 // pred_region
          %675 = dma.done %s667, 128
        $region76: #{tpu_custom_call.1} parent=71 // pred_fallthru
          _
        %s676 = sand.u32 %s45, 1
        %s677 = scalar_lea.sflag [#allocation6], %s676
        %s678 = sand.u32 %s91, 1
        %s679 = scalar_lea.vmem [#allocation5], %s678
        // Predicated region
        $region77: #{tpu_custom_call.1} parent=71 // pred_check
          %p680 = pneg %p104
        $region78: #{tpu_custom_call.1} parent=71 // pred_check_branch
          %682 = sbr.rel (%p680) target = $region80
        $region79: #{tpu_custom_call.1} parent=71 // pred_region
          %684 = dma.done %s677, 16
        $region80: #{tpu_custom_call.1} parent=71 // pred_fallthru
          _
        %s685 = sand.u32 %s45, 1
        %s686 = scalar_lea.sflag [#allocation6], %s685
        %s687 = sand.u32 %s117, 1
        %s688 = scalar_lea.vmem [#allocation7], %s687
        // Predicated region
        $region81: #{tpu_custom_call.1} parent=71 // pred_check
          %p689 = pneg %p130
        $region82: #{tpu_custom_call.1} parent=71 // pred_check_branch
          %691 = sbr.rel (%p689) target = $region84
        $region83: #{tpu_custom_call.1} parent=71 // pred_region
          %693 = dma.done %s686, 16
        $region84: #{tpu_custom_call.1} parent=71 // pred_fallthru
          _
        %s694 = sand.u32 %s45, 1
        %s695 = scalar_lea.sflag [#allocation9], %s694
        %s696 = sand.u32 %s143, 1
        %s697 = smul.addr %s696, 192
        %s698 = scalar_lea.vmem [#allocation8], %s697
        // Predicated region
        $region85: #{tpu_custom_call.1} parent=71 // pred_check
          %p699 = pneg %p156
        $region86: #{tpu_custom_call.1} parent=71 // pred_check_branch
          %701 = sbr.rel (%p699) target = $region88
        $region87: #{tpu_custom_call.1} parent=71 // pred_region
          %703 = dma.done %s695, 3072
        $region88: #{tpu_custom_call.1} parent=71 // pred_fallthru
          _
        %s704 = sand.u32 %s45, 1
        %s705 = scalar_lea.sflag [#allocation9], %s704
        %s706 = sand.u32 %s169, 1
        %s707 = smul.addr %s706, 3
        %s708 = scalar_lea.vmem [#allocation10], %s707
        // Predicated region
        $region89: #{tpu_custom_call.1} parent=71 // pred_check
          %p709 = pneg %p182
        $region90: #{tpu_custom_call.1} parent=71 // pred_check_branch
          %711 = sbr.rel (%p709) target = $region92
        $region91: #{tpu_custom_call.1} parent=71 // pred_region
          %713 = dma.done %s705, 48
        $region92: #{tpu_custom_call.1} parent=71 // pred_fallthru
          _
        %s714 = sand.u32 %s45, 1
        %s715 = scalar_lea.sflag [#allocation12], %s714
        %s716 = sand.u32 %s195, 1
        %s717 = smul.addr %s716, 64
        %s718 = scalar_lea.vmem [#allocation11], %s717
        // Predicated region
        $region93: #{tpu_custom_call.1} parent=71 // pred_check
          %p719 = pneg %p208
        $region94: #{tpu_custom_call.1} parent=71 // pred_check_branch
          %721 = sbr.rel (%p719) target = $region96
        $region95: #{tpu_custom_call.1} parent=71 // pred_region
          %723 = dma.done %s715, 1024
        $region96: #{tpu_custom_call.1} parent=71 // pred_fallthru
          _
        %s724 = sand.u32 %s45, 1
        %s725 = scalar_lea.sflag [#allocation12], %s724
        %s726 = sand.u32 %s221, 1
        %s727 = scalar_lea.vmem [#allocation13], %s726
        // Predicated region
        $region97: #{tpu_custom_call.1} parent=71 // pred_check
          %p728 = pneg %p234
        $region98: #{tpu_custom_call.1} parent=71 // pred_check_branch
          %730 = sbr.rel (%p728) target = $region100
        $region99: #{tpu_custom_call.1} parent=71 // pred_region
          %732 = dma.done %s725, 16
        $region100: #{tpu_custom_call.1} parent=71 // pred_fallthru
          _
        %s733 = sand.u32 %s45, 1
        %s734 = scalar_lea.sflag [#allocation15], %s733
        %s735 = sand.u32 %s247, 1
        %s736 = scalar_lea.vmem [#allocation14], %s735
        // Predicated region
        $region101: #{tpu_custom_call.1} parent=71 // pred_check
          %p737 = pneg %p260
        $region102: #{tpu_custom_call.1} parent=71 // pred_check_branch
          %739 = sbr.rel (%p737) target = $region104
        $region103: #{tpu_custom_call.1} parent=71 // pred_region
          %741 = dma.done %s734, 16
        $region104: #{tpu_custom_call.1} parent=71 // pred_fallthru
          _
        %s742 = sand.u32 %s45, 1
        %s743 = scalar_lea.sflag [#allocation15], %s742
        %s744 = sand.u32 %s273, 1
        %s745 = scalar_lea.vmem [#allocation16], %s744
        // Predicated region
        $region105: #{tpu_custom_call.1} parent=71 // pred_check
          %p746 = pneg %p286
        $region106: #{tpu_custom_call.1} parent=71 // pred_check_branch
          %748 = sbr.rel (%p746) target = $region108
        $region107: #{tpu_custom_call.1} parent=71 // pred_region
          %750 = dma.done %s743, 16
        $region108: #{tpu_custom_call.1} parent=71 // pred_fallthru
          _
        %s751 = sand.u32 %s45, 1
        %s752 = scalar_lea.sflag [#allocation18], %s751
        %s753 = sand.u32 %s299, 1
        %s754 = smul.addr %s753, 256
        %s755 = scalar_lea.vmem [#allocation17], %s754
        // Predicated region
        $region109: #{tpu_custom_call.1} parent=71 // pred_check
          %p756 = pneg %p312
        $region110: #{tpu_custom_call.1} parent=71 // pred_check_branch
          %758 = sbr.rel (%p756) target = $region112
        $region111: #{tpu_custom_call.1} parent=71 // pred_region
          %760 = dma.done %s752, 4096
        $region112: #{tpu_custom_call.1} parent=71 // pred_fallthru
          _
        %s761 = sand.u32 %s45, 1
        %s762 = scalar_lea.sflag [#allocation18], %s761
        %s763 = sand.u32 %s351, 1
        %s764 = smul.addr %s763, 256
        %s765 = scalar_lea.vmem [#allocation19], %s764
        // Predicated region
        $region113: #{tpu_custom_call.1} parent=71 // pred_check
          %p766 = pneg %p364
        $region114: #{tpu_custom_call.1} parent=71 // pred_check_branch
          %768 = sbr.rel (%p766) target = $region116
        $region115: #{tpu_custom_call.1} parent=71 // pred_region
          %770 = dma.done %s762, 4096
        $region116: #{tpu_custom_call.1} parent=71 // pred_fallthru
          _
        %s771 = sand.u32 %s65, 1
        %s772 = scalar_lea.sflag [#allocation3], %s771
        %s773 = sand.u32 %s65, 1
        %s774 = smul.addr %s773, 8
        %s775 = scalar_lea.vmem [#allocation2], %s774
        %p776 = pneg %p78
        %p777 = pneg %p75
        %s778 = sand.u32 %s45, 1
        %s779 = scalar_lea.sflag [#allocation6], %s778
        %s780 = sand.u32 %s91, 1
        %s781 = scalar_lea.vmem [#allocation5], %s780
        %p782 = pneg %p104
        %p783 = pneg %p101
        %s784 = sand.u32 %s45, 1
        %s785 = scalar_lea.sflag [#allocation6], %s784
        %s786 = sand.u32 %s117, 1
        %s787 = scalar_lea.vmem [#allocation7], %s786
        %p788 = pneg %p130
        %p789 = pneg %p127
        %s790 = sand.u32 %s45, 1
        %s791 = scalar_lea.sflag [#allocation9], %s790
        %s792 = sand.u32 %s143, 1
        %s793 = smul.addr %s792, 192
        %s794 = scalar_lea.vmem [#allocation8], %s793
        %p795 = pneg %p156
        %p796 = pneg %p153
        %s797 = sand.u32 %s45, 1
        %s798 = scalar_lea.sflag [#allocation9], %s797
        %s799 = sand.u32 %s169, 1
        %s800 = smul.addr %s799, 3
        %s801 = scalar_lea.vmem [#allocation10], %s800
        %p802 = pneg %p182
        %p803 = pneg %p179
        %s804 = sand.u32 %s45, 1
        %s805 = scalar_lea.sflag [#allocation12], %s804
        %s806 = sand.u32 %s195, 1
        %s807 = smul.addr %s806, 64
        %s808 = scalar_lea.vmem [#allocation11], %s807
        %p809 = pneg %p208
        %p810 = pneg %p205
        %s811 = sand.u32 %s45, 1
        %s812 = scalar_lea.sflag [#allocation12], %s811
        %s813 = sand.u32 %s221, 1
        %s814 = scalar_lea.vmem [#allocation13], %s813
        %p815 = pneg %p234
        %p816 = pneg %p231
        %s817 = sand.u32 %s45, 1
        %s818 = scalar_lea.sflag [#allocation15], %s817
        %s819 = sand.u32 %s247, 1
        %s820 = scalar_lea.vmem [#allocation14], %s819
        %p821 = pneg %p260
        %p822 = pneg %p257
        %s823 = sand.u32 %s45, 1
        %s824 = scalar_lea.sflag [#allocation15], %s823
        %s825 = sand.u32 %s273, 1
        %s826 = scalar_lea.vmem [#allocation16], %s825
        %p827 = pneg %p286
        %p828 = pneg %p283
        %s829 = sand.u32 %s45, 1
        %s830 = scalar_lea.sflag [#allocation18], %s829
        %s831 = sand.u32 %s299, 1
        %s832 = smul.addr %s831, 256
        %s833 = scalar_lea.vmem [#allocation17], %s832
        %p834 = pneg %p312
        %p835 = pneg %p309
        %p836 = scmp.lt.s32.totalorder %s50, 1
        %s837 = scalar_select %p836, %s50, 1
        %s838 = smul.addr %s837, 4
        %s839 = scalar_lea.vmem %s10, %s838
        %p840 = pneg %p338
        %p841 = pneg %p335
        %s842 = sand.u32 %s45, 1
        %s843 = scalar_lea.sflag [#allocation18], %s842
        %s844 = sand.u32 %s351, 1
        %s845 = smul.addr %s844, 256
        %s846 = scalar_lea.vmem [#allocation19], %s845
        %p847 = pneg %p364
        %p848 = pneg %p361
        %p849 = scmp.lt.s32.totalorder %s50, 1
        %s850 = scalar_select %p849, %s50, 1
        %s851 = scalar_lea.vmem %s12, %s850
        %p852 = pneg %p390
        %p853 = pneg %p387
        %p854 = pneg %p416
        %p855 = pneg %p413
        %s856 = sand.u32 %s403, 1
        %s857 = scalar_lea.sflag [#allocation4], %s856
        %s858 = sand.u32 %s403, 1
        %s859 = smul.addr %s858, 8
        %s860 = scalar_lea.vmem [#allocation20], %s859
        %p861 = scmp.lt.s32.totalorder %s50, 1
        %s862 = scalar_select %p861, %s50, 1
        %s863 = smul.addr %s862, 4
        %s864 = scalar_lea.vmem %s10, %s863
        %p865 = scmp.lt.s32.totalorder %s50, 1
        %s866 = scalar_select %p865, %s50, 1
        %s867 = scalar_lea.vmem %s12, %s866
        %p869 = scmp.eq.s32.totalorder %s50, 0
        // Predicated region
        $region117: #{tpu_custom_call.1} parent=71 // pred_check
          %p870 = pneg %p869
        $region118: #{tpu_custom_call.1} parent=71 // pred_check_branch
          %872 = sbr.rel (%p870) target = $region120
        $region119: #{tpu_custom_call.1} parent=71 // pred_region
          %v873 = vld [vmem:[%s670] sm:$0xff]
          %874 = vst [vmem:[%s860] sm:$0xff] %v873
        $region120: #{tpu_custom_call.1} parent=71 // pred_fallthru
          _
        %v875 = vld [vmem:[%s860] sm:$0xff]
        %v876 = vld [vmem:[%s679] sm:$0x1]
        %v877 = vld [vmem:[%s688] sm:$0x1]
        %878 = vadd.xlane.f32.xlu0 %v875
        %v879 = vpop.xlane.xlu0 %878
        %v880 = vrcp.pop 128.0
        %v881 = vmul.f32 128.0, %v880
        %v882 = vsub.f32 1.0, %v881
        %v883 = vmul.f32 %v880, %v882
        %v884 = vadd.f32 %v880, %v883
        %vm885 = vweird.f32 %v880
        %v886 = vsel %vm885, %v880, %v884
        %v887 = vmul.f32 %v879, %v886
        %v888 = vmul.f32 %v875, %v875
        %889 = vadd.xlane.f32.xlu0 %v888
        %v890 = vpop.xlane.xlu0 %889
        %v891 = vmul.f32 %v890, %v886
        %v892 = vmul.f32 %v887, %v887
        %v893 = vsub.f32 %v891, %v892
        %v894 = vadd.f32 %v893, 1e-05
        %v895 = vrsqrt.pop %v894
        %v896 = vmul.f32 %v895, %v894
        %v897 = vmul.f32 %v896, %v895
        %v898 = vmul.f32 0.5, %v897
        %v899 = vsub.f32 1.5, %v898
        %v900 = vmul.f32 %v895, %v899
        %vm901 = vweird.f32 %v894
        %vm902 = vweird.f32 %v895
        %vm903 = vmor %vm901, %vm902
        %v904 = vsel %vm903, %v895, %v900
        %v905 = vsub.f32 %v875, %v887
        %v907 = vperm.slane %v876, 0
        %v909 = vmul.f32 %v907, %v904
        %v910 = vmul.f32 %v905, %v909
        %v912 = vperm.slane %v877, 0
        %v914 = vadd.f32 %v910, %v912
        %v915 = vpack.c.bf16 %v914, %v914
        %v916 = vld [vmem:[%s698] sm:$0xff]
        %v917 = vld [vmem:[%s698 + $0x8] sm:$0xf]
        %v918 = vld [vmem:[%s698 + $0xc] sm:$0xff]
        %v919 = vld [vmem:[%s698 + $0x14] sm:$0xf]
        %v920 = vld [vmem:[%s698 + $0x18] sm:$0xff]
        %v921 = vld [vmem:[%s698 + $0x20] sm:$0xf]
        %v922 = vld [vmem:[%s698 + $0x24] sm:$0xff]
        %v923 = vld [vmem:[%s698 + $0x2c] sm:$0xf]
        %v924 = vld [vmem:[%s698 + $0x30] sm:$0xff]
        %v925 = vld [vmem:[%s698 + $0x38] sm:$0xf]
        %v926 = vld [vmem:[%s698 + $0x3c] sm:$0xff]
        %v927 = vld [vmem:[%s698 + $0x44] sm:$0xf]
        %v928 = vld [vmem:[%s698 + $0x48] sm:$0xff]
        %v929 = vld [vmem:[%s698 + $0x50] sm:$0xf]
        %v930 = vld [vmem:[%s698 + $0x54] sm:$0xff]
        %v931 = vld [vmem:[%s698 + $0x5c] sm:$0xf]
        %v932 = vld [vmem:[%s698 + $0x60] sm:$0xff]
        %v933 = vld [vmem:[%s698 + $0x68] sm:$0xf]
        %v934 = vld [vmem:[%s698 + $0x6c] sm:$0xff]
        %v935 = vld [vmem:[%s698 + $0x74] sm:$0xf]
        %v936 = vld [vmem:[%s698 + $0x78] sm:$0xff]
        %v937 = vld [vmem:[%s698 + $0x80] sm:$0xf]
        %v938 = vld [vmem:[%s698 + $0x84] sm:$0xff]
        %v939 = vld [vmem:[%s698 + $0x8c] sm:$0xf]
        %v940 = vld [vmem:[%s698 + $0x90] sm:$0xff]
        %v941 = vld [vmem:[%s698 + $0x98] sm:$0xf]
        %v942 = vld [vmem:[%s698 + $0x9c] sm:$0xff]
        %v943 = vld [vmem:[%s698 + $0xa4] sm:$0xf]
        %v944 = vld [vmem:[%s698 + $0xa8] sm:$0xff]
        %v945 = vld [vmem:[%s698 + $0xb0] sm:$0xf]
        %v946 = vld [vmem:[%s698 + $0xb4] sm:$0xff]
        %v947 = vld [vmem:[%s698 + $0xbc] sm:$0xf]
        %v948 = vld [vmem:[%s708] sm:$0x7]
        %v950 = vperm.slane %v948, 0
        %v951 = vperm.slane %v948, 1
        %v952 = vperm.slane %v948, 2
        %v988 = vunpack.c.l.b16 %v916
        %v989 = vunpack.c.h.b16 %v916
        %v990 = vunpack.c.l.b16 %v917
        %v991 = vunpack.c.l.b16 %v918
        %v992 = vunpack.c.h.b16 %v918
        %v993 = vunpack.c.l.b16 %v919
        %v994 = vunpack.c.l.b16 %v920
        %v995 = vunpack.c.h.b16 %v920
        %v996 = vunpack.c.l.b16 %v921
        %v997 = vunpack.c.l.b16 %v922
        %v998 = vunpack.c.h.b16 %v922
        %v999 = vunpack.c.l.b16 %v923
        %v1000 = vunpack.c.l.b16 %v924
        %v1001 = vunpack.c.h.b16 %v924
        %v1002 = vunpack.c.l.b16 %v925
        %v1003 = vunpack.c.l.b16 %v926
        %v1004 = vunpack.c.h.b16 %v926
        %v1005 = vunpack.c.l.b16 %v927
        %v1006 = vunpack.c.l.b16 %v928
        %v1007 = vunpack.c.h.b16 %v928
        %v1008 = vunpack.c.l.b16 %v929
        %v1009 = vunpack.c.l.b16 %v930
        %v1010 = vunpack.c.h.b16 %v930
        %v1011 = vunpack.c.l.b16 %v931
        %v1012 = vunpack.c.l.b16 %v932
        %v1013 = vunpack.c.h.b16 %v932
        %v1014 = vunpack.c.l.b16 %v933
        %v1015 = vunpack.c.l.b16 %v934
        %v1016 = vunpack.c.h.b16 %v934
        %v1017 = vunpack.c.l.b16 %v935
        %v1018 = vunpack.c.l.b16 %v936
        %v1019 = vunpack.c.h.b16 %v936
        %v1020 = vunpack.c.l.b16 %v937
        %v1021 = vunpack.c.l.b16 %v938
        %v1022 = vunpack.c.h.b16 %v938
        %v1023 = vunpack.c.l.b16 %v939
        %v1024 = vunpack.c.l.b16 %v940
        %v1025 = vunpack.c.h.b16 %v940
        %v1026 = vunpack.c.l.b16 %v941
        %v1027 = vunpack.c.l.b16 %v942
        %v1028 = vunpack.c.h.b16 %v942
        %v1029 = vunpack.c.l.b16 %v943
        %v1030 = vunpack.c.l.b16 %v944
        %v1031 = vunpack.c.h.b16 %v944
        %v1032 = vunpack.c.l.b16 %v945
        %v1033 = vunpack.c.l.b16 %v946
        %v1034 = vunpack.c.h.b16 %v946
        %v1035 = vunpack.c.l.b16 %v947
        %v1036 = vpack.c.b16 %v991, %v988
        %v1037 = vpack.c.b16 %v992, %v989
        %v1038 = vpack.c.b16 %v993, %v990
        %v1039 = vpack.c.b16 %v997, %v994
        %v1040 = vpack.c.b16 %v998, %v995
        %v1041 = vpack.c.b16 %v999, %v996
        %v1042 = vpack.c.b16 %v1003, %v1000
        %v1043 = vpack.c.b16 %v1004, %v1001
        %v1044 = vpack.c.b16 %v1005, %v1002
        %v1045 = vpack.c.b16 %v1009, %v1006
        %v1046 = vpack.c.b16 %v1010, %v1007
        %v1047 = vpack.c.b16 %v1011, %v1008
        %v1048 = vpack.c.b16 %v1015, %v1012
        %v1049 = vpack.c.b16 %v1016, %v1013
        %v1050 = vpack.c.b16 %v1017, %v1014
        %v1051 = vpack.c.b16 %v1021, %v1018
        %v1052 = vpack.c.b16 %v1022, %v1019
        %v1053 = vpack.c.b16 %v1023, %v1020
        %v1054 = vpack.c.b16 %v1027, %v1024
        %v1055 = vpack.c.b16 %v1028, %v1025
        %v1056 = vpack.c.b16 %v1029, %v1026
        %v1057 = vpack.c.b16 %v1033, %v1030
        %v1058 = vpack.c.b16 %v1034, %v1031
        %v1059 = vpack.c.b16 %v1035, %v1032
        %1084 = vmatpush.bf16.msra.mxu0 %v1057
        %1085 = vmatpush.bf16.msra.mxu0 %v1054
        %1086 = vmatpush.bf16.msra.mxu0 %v1051
        %1087 = vmatpush.bf16.msra.mxu0 %v1048
        %1088 = vmatpush.bf16.msra.mxu0 %v1045
        %1089 = vmatpush.bf16.msra.mxu0 %v1042
        %1090 = vmatpush.bf16.msra.mxu0 %v1039
        %1091 = vmatpush.bf16.msra.mxu0 %v1036
        %1092 = vmatmul.bf16.gmra.mxu0 %v915
        %v1093 = vpop.f32.mrf.mxu0
        %v1094 = vadd.f32 %v950, %v1093
        %v1095 = vpop.f32.mrf.mxu0
        %1096 = vdwg.mxu0
        %1097 = vmatpush.bf16.msra.mxu0 %v1058
        %1098 = vmatpush.bf16.msra.mxu0 %v1055
        %1099 = vmatpush.bf16.msra.mxu0 %v1052
        %1100 = vmatpush.bf16.msra.mxu0 %v1049
        %1101 = vmatpush.bf16.msra.mxu0 %v1046
        %1102 = vmatpush.bf16.msra.mxu0 %v1043
        %1103 = vmatpush.bf16.msra.mxu0 %v1040
        %1104 = vmatpush.bf16.msra.mxu0 %v1037
        %1105 = vmatmul.bf16.gmra.mxu0 %v915
        %v1106 = vpop.f32.mrf.mxu0
        %v1107 = vadd.f32 %v951, %v1106
        %v1108 = vpop.f32.mrf.mxu0
        %1109 = vdwg.mxu0
        %1110 = vmatpush.bf16.msra.mxu0 %v1059
        %1111 = vmatpush.bf16.msra.mxu0 %v1056
        %1112 = vmatpush.bf16.msra.mxu0 %v1053
        %1113 = vmatpush.bf16.msra.mxu0 %v1050
        %1114 = vmatpush.bf16.msra.mxu0 %v1047
        %1115 = vmatpush.bf16.msra.mxu0 %v1044
        %1116 = vmatpush.bf16.msra.mxu0 %v1041
        %1117 = vmatpush.bf16.msra.mxu0 %v1038
        %1118 = vmatmul.bf16.gmra.mxu0 %v915
        %v1119 = vpop.f32.mrf.mxu0
        %v1120 = vadd.f32 %v952, %v1119
        %v1121 = vpop.f32.mrf.mxu0
        %1122 = vdwg.mxu0
        %v1123 = vpack.c.bf16 %v1107, %v1094
        %v1124 = vpack.c.bf16 %v1120, %v1120
        %v1126 = vrot.slane %v1123, 4
        %vm1127 = vcmask 261120
        %v1129 = vsel %vm1127, %v1123, 0
        %v1132 = vsel %vm1127, %v1126, 0
        %1134 = vmatpush.bf16.xpose.msra.mxu0 0
        %1135 = vmatpush.bf16.xpose.msra.mxu0 0
        %1136 = vmatpush.bf16.xpose.msra.mxu0 0
        %1137 = vmatpush.bf16.xpose.msra.mxu0 0
        %1138 = vmatpush.bf16.xpose.msra.mxu0 0
        %1139 = vmatpush.bf16.xpose.msra.mxu0 0
        %1140 = vmatpush.bf16.xpose.msra.mxu0 0
        %1141 = vmatpush.bf16.xpose.msra.mxu0 %v1132
        %1142 = vmatmul.bf16.gmra.mxu0 %v1129
        %v1143 = vpop.f32.mrf.mxu0
        %v1144 = vadd.f32 0.0, %v1143
        %v1145 = vpop.f32.mrf.mxu0
        %1146 = vdwg.mxu0
        %1147 = vrot.lane.b32.xlu0 %v1123, 96
        %v1148 = vpop.permute.xlu0 %1147
        %v1149 = vrot.slane %v1148, 4
        %v1150 = vunpack.c.l.b16 %v1123
        %v1151 = vpack.c.b16 %v1150, %v1150
        %1152 = vrot.lane.b32.xlu0 %v1151, 96
        %v1153 = vpop.permute.xlu0 %1152
        %v1155 = vsel %vm1127, %v1153, 0
        %v1158 = vsel %vm1127, %v1149, 0
        %1160 = vmatpush.bf16.xpose.msra.mxu0 0
        %1161 = vmatpush.bf16.xpose.msra.mxu0 0
        %1162 = vmatpush.bf16.xpose.msra.mxu0 0
        %1163 = vmatpush.bf16.xpose.msra.mxu0 0
        %1164 = vmatpush.bf16.xpose.msra.mxu0 0
        %1165 = vmatpush.bf16.xpose.msra.mxu0 0
        %1166 = vmatpush.bf16.xpose.msra.mxu0 0
        %1167 = vmatpush.bf16.xpose.msra.mxu0 %v1158
        %1168 = vmatmul.bf16.gmra.mxu0 %v1155
        %v1169 = vpop.f32.mrf.mxu0
        %v1170 = vadd.f32 0.0, %v1169
        %v1171 = vpop.f32.mrf.mxu0
        %1172 = vdwg.mxu0
        %1173 = vrot.lane.b32.xlu0 %v1123, 64
        %v1174 = vpop.permute.xlu0 %1173
        %v1175 = vrot.slane %v1174, 4
        %1176 = vrot.lane.b32.xlu0 %v1151, 64
        %v1177 = vpop.permute.xlu0 %1176
        %v1179 = vsel %vm1127, %v1177, 0
        %v1182 = vsel %vm1127, %v1175, 0
        %1184 = vmatpush.bf16.xpose.msra.mxu0 0
        %1185 = vmatpush.bf16.xpose.msra.mxu0 0
        %1186 = vmatpush.bf16.xpose.msra.mxu0 0
        %1187 = vmatpush.bf16.xpose.msra.mxu0 0
        %1188 = vmatpush.bf16.xpose.msra.mxu0 0
        %1189 = vmatpush.bf16.xpose.msra.mxu0 0
        %1190 = vmatpush.bf16.xpose.msra.mxu0 0
        %1191 = vmatpush.bf16.xpose.msra.mxu0 %v1182
        %1192 = vmatmul.bf16.gmra.mxu0 %v1179
        %v1193 = vpop.f32.mrf.mxu0
        %v1194 = vadd.f32 0.0, %v1193
        %v1195 = vpop.f32.mrf.mxu0
        %1196 = vdwg.mxu0
        %1197 = vrot.lane.b32.xlu0 %v1123, 32
        %v1198 = vpop.permute.xlu0 %1197
        %v1199 = vrot.slane %v1198, 4
        %1200 = vrot.lane.b32.xlu0 %v1151, 32
        %v1201 = vpop.permute.xlu0 %1200
        %v1203 = vsel %vm1127, %v1201, 0
        %v1206 = vsel %vm1127, %v1199, 0
        %1208 = vmatpush.bf16.xpose.msra.mxu0 0
        %1209 = vmatpush.bf16.xpose.msra.mxu0 0
        %1210 = vmatpush.bf16.xpose.msra.mxu0 0
        %1211 = vmatpush.bf16.xpose.msra.mxu0 0
        %1212 = vmatpush.bf16.xpose.msra.mxu0 0
        %1213 = vmatpush.bf16.xpose.msra.mxu0 0
        %1214 = vmatpush.bf16.xpose.msra.mxu0 0
        %1215 = vmatpush.bf16.xpose.msra.mxu0 %v1206
        %1216 = vmatmul.bf16.gmra.mxu0 %v1203
        %v1217 = vpop.f32.mrf.mxu0
        %v1218 = vadd.f32 0.0, %v1217
        %v1219 = vpop.f32.mrf.mxu0
        %1220 = vdwg.mxu0
        %vm1221 = vcmask 64512
        %v1222 = vsel %vm1221, %v1144, -inf
        %1223 = vmax.xlane.f32.xlu0 %v1222
        %v1224 = vpop.xlane.xlu0 %1223
        %v1225 = vsel %vm1221, %v1170, -inf
        %1226 = vmax.xlane.f32.xlu0 %v1225
        %v1227 = vpop.xlane.xlu0 %1226
        %v1228 = vsel %vm1221, %v1194, -inf
        %1229 = vmax.xlane.f32.xlu0 %v1228
        %v1230 = vpop.xlane.xlu0 %1229
        %v1231 = vsel %vm1221, %v1218, -inf
        %1232 = vmax.xlane.f32.xlu0 %v1231
        %v1233 = vpop.xlane.xlu0 %1232
        %v1234 = vsub.f32 %v1144, %v1224
        %v1235 = vsub.f32 %v1170, %v1227
        %v1236 = vsub.f32 %v1194, %v1230
        %v1237 = vsub.f32 %v1218, %v1233
        %v1238 = vmul.f32 %v1234, 1.442695
        %v1239 = vpow.pop %v1238
        %v1240 = vmul.f32 %v1235, 1.442695
        %v1241 = vpow.pop %v1240
        %v1242 = vmul.f32 %v1236, 1.442695
        %v1243 = vpow.pop %v1242
        %v1244 = vmul.f32 %v1237, 1.442695
        %v1245 = vpow.pop %v1244
        %v1246 = vsel %vm1221, %v1239, 0.0
        %1247 = vadd.xlane.f32.xlu0 %v1246
        %v1248 = vpop.xlane.xlu0 %1247
        %v1249 = vsel %vm1221, %v1241, 0.0
        %1250 = vadd.xlane.f32.xlu0 %v1249
        %v1251 = vpop.xlane.xlu0 %1250
        %v1252 = vsel %vm1221, %v1243, 0.0
        %1253 = vadd.xlane.f32.xlu0 %v1252
        %v1254 = vpop.xlane.xlu0 %1253
        %v1255 = vsel %vm1221, %v1245, 0.0
        %1256 = vadd.xlane.f32.xlu0 %v1255
        %v1257 = vpop.xlane.xlu0 %1256
        %v1258 = vrcp.pop %v1248
        %v1259 = vmul.f32 %v1248, %v1258
        %v1260 = vsub.f32 1.0, %v1259
        %v1261 = vmul.f32 %v1258, %v1260
        %v1262 = vadd.f32 %v1258, %v1261
        %vm1263 = vweird.f32 %v1248
        %vm1264 = vweird.f32 %v1258
        %vm1265 = vmor %vm1263, %vm1264
        %v1266 = vsel %vm1265, %v1258, %v1262
        %v1267 = vand.u32 2147483647, %v1248
        %vm1268 = vcmp.eq.f32.partialorder %v1267, 8.507059e+37
        %v1269 = vand.u32 %v1248, 2147483648
        %v1270 = vor.u32 1.1754944e-38, %v1269
        %v1271 = vsel %vm1268, %v1270, %v1266
        %v1272 = vmul.f32 %v1239, %v1271
        %v1273 = vrcp.pop %v1251
        %v1274 = vmul.f32 %v1251, %v1273
        %v1275 = vsub.f32 1.0, %v1274
        %v1276 = vmul.f32 %v1273, %v1275
        %v1277 = vadd.f32 %v1273, %v1276
        %vm1278 = vweird.f32 %v1251
        %vm1279 = vweird.f32 %v1273
        %vm1280 = vmor %vm1278, %vm1279
        %v1281 = vsel %vm1280, %v1273, %v1277
        %v1282 = vand.u32 2147483647, %v1251
        %vm1283 = vcmp.eq.f32.partialorder %v1282, 8.507059e+37
        %v1284 = vand.u32 %v1251, 2147483648
        %v1285 = vor.u32 1.1754944e-38, %v1284
        %v1286 = vsel %vm1283, %v1285, %v1281
        %v1287 = vmul.f32 %v1241, %v1286
        %v1288 = vrcp.pop %v1254
        %v1289 = vmul.f32 %v1254, %v1288
        %v1290 = vsub.f32 1.0, %v1289
        %v1291 = vmul.f32 %v1288, %v1290
        %v1292 = vadd.f32 %v1288, %v1291
        %vm1293 = vweird.f32 %v1254
        %vm1294 = vweird.f32 %v1288
        %vm1295 = vmor %vm1293, %vm1294
        %v1296 = vsel %vm1295, %v1288, %v1292
        %v1297 = vand.u32 2147483647, %v1254
        %vm1298 = vcmp.eq.f32.partialorder %v1297, 8.507059e+37
        %v1299 = vand.u32 %v1254, 2147483648
        %v1300 = vor.u32 1.1754944e-38, %v1299
        %v1301 = vsel %vm1298, %v1300, %v1296
        %v1302 = vmul.f32 %v1243, %v1301
        %v1303 = vrcp.pop %v1257
        %v1304 = vmul.f32 %v1257, %v1303
        %v1305 = vsub.f32 1.0, %v1304
        %v1306 = vmul.f32 %v1303, %v1305
        %v1307 = vadd.f32 %v1303, %v1306
        %vm1308 = vweird.f32 %v1257
        %vm1309 = vweird.f32 %v1303
        %vm1310 = vmor %vm1308, %vm1309
        %v1311 = vsel %vm1310, %v1303, %v1307
        %v1312 = vand.u32 2147483647, %v1257
        %vm1313 = vcmp.eq.f32.partialorder %v1312, 8.507059e+37
        %v1314 = vand.u32 %v1257, 2147483648
        %v1315 = vor.u32 1.1754944e-38, %v1314
        %v1316 = vsel %vm1313, %v1315, %v1311
        %v1317 = vmul.f32 %v1245, %v1316
        %v1318 = vpack.c.bf16 %v1272, %v1272
        %v1319 = vpack.c.bf16 %v1287, %v1287
        %v1320 = vpack.c.bf16 %v1302, %v1302
        %v1321 = vpack.c.bf16 %v1317, %v1317
        %v1322 = vld [vmem:[%s718] sm:$0xf]
        %v1323 = vld [vmem:[%s718 + $0x4] sm:$0xf]
        %v1324 = vld [vmem:[%s718 + $0x8] sm:$0xf]
        %v1325 = vld [vmem:[%s718 + $0xc] sm:$0xf]
        %v1326 = vld [vmem:[%s718 + $0x10] sm:$0xf]
        %v1327 = vld [vmem:[%s718 + $0x14] sm:$0xf]
        %v1328 = vld [vmem:[%s718 + $0x18] sm:$0xf]
        %v1329 = vld [vmem:[%s718 + $0x1c] sm:$0xf]
        %v1330 = vld [vmem:[%s718 + $0x20] sm:$0xf]
        %v1331 = vld [vmem:[%s718 + $0x24] sm:$0xf]
        %v1332 = vld [vmem:[%s718 + $0x28] sm:$0xf]
        %v1333 = vld [vmem:[%s718 + $0x2c] sm:$0xf]
        %v1334 = vld [vmem:[%s718 + $0x30] sm:$0xf]
        %v1335 = vld [vmem:[%s718 + $0x34] sm:$0xf]
        %v1336 = vld [vmem:[%s718 + $0x38] sm:$0xf]
        %v1337 = vld [vmem:[%s718 + $0x3c] sm:$0xf]
        %v1339 = vsel %vm1221, %v1318, 0
        %vm1341 = vcmask 1043456
        %v1343 = vsel %vm1341, %v1124, 0
        %1345 = vmatpush.bf16.msra.mxu0 0
        %1346 = vmatpush.bf16.msra.mxu0 0
        %1347 = vmatpush.bf16.msra.mxu0 0
        %1348 = vmatpush.bf16.msra.mxu0 0
        %1349 = vmatpush.bf16.msra.mxu0 0
        %1350 = vmatpush.bf16.msra.mxu0 0
        %1351 = vmatpush.bf16.msra.mxu0 0
        %1352 = vmatpush.bf16.msra.mxu0 %v1343
        %1353 = vmatmul.bf16.gmra.mxu0 %v1339
        %v1354 = vpop.f32.mrf.mxu0
        %v1355 = vadd.f32 0.0, %v1354
        %v1356 = vpop.f32.mrf.mxu0
        %1357 = vdwg.mxu0
        %v1358 = vpack.c.bf16 %v1355, %v1355
        %v1360 = vunpack.c.l.b16 %v1124
        %v1361 = vpack.c.b16 %v1360, %v1360
        %1362 = vrot.lane.b32.xlu0 %v1361, 96
        %v1363 = vpop.permute.xlu0 %1362
        %v1365 = vsel %vm1221, %v1319, 0
        %v1368 = vsel %vm1341, %v1363, 0
        %1370 = vmatpush.bf16.msra.mxu0 0
        %1371 = vmatpush.bf16.msra.mxu0 0
        %1372 = vmatpush.bf16.msra.mxu0 0
        %1373 = vmatpush.bf16.msra.mxu0 0
        %1374 = vmatpush.bf16.msra.mxu0 0
        %1375 = vmatpush.bf16.msra.mxu0 0
        %1376 = vmatpush.bf16.msra.mxu0 0
        %1377 = vmatpush.bf16.msra.mxu0 %v1368
        %1378 = vmatmul.bf16.gmra.mxu0 %v1365
        %v1379 = vpop.f32.mrf.mxu0
        %v1380 = vadd.f32 0.0, %v1379
        %v1381 = vpop.f32.mrf.mxu0
        %1382 = vdwg.mxu0
        %v1383 = vpack.c.bf16 %v1380, %v1380
        %v1388 = vunpack.c.l.b16 %v1326
        %v1389 = vunpack.c.l.b16 %v1327
        %v1390 = vunpack.c.l.b16 %v1328
        %v1391 = vunpack.c.l.b16 %v1329
        %v1392 = vpack.c.b16 %v1389, %v1388
        %v1393 = vpack.c.b16 %v1391, %v1390
        %v1397 = vsel %vm1127, %v1383, 0
        %1399 = vmatpush.bf16.msra.mxu0 0
        %1400 = vmatpush.bf16.msra.mxu0 0
        %1401 = vmatpush.bf16.msra.mxu0 0
        %1402 = vmatpush.bf16.msra.mxu0 0
        %1403 = vmatpush.bf16.msra.mxu0 0
        %1404 = vmatpush.bf16.msra.mxu0 0
        %1405 = vmatpush.bf16.msra.mxu0 %v1393
        %1406 = vmatpush.bf16.msra.mxu0 %v1392
        %1407 = vmatmul.bf16.gmra.mxu0 %v1397
        %v1408 = vpop.f32.mrf.mxu0
        %v1409 = vadd.f32 0.0, %v1408
        %v1410 = vpop.f32.mrf.mxu0
        %1411 = vdwg.mxu0
        %v1416 = vunpack.c.l.b16 %v1322
        %v1417 = vunpack.c.l.b16 %v1323
        %v1418 = vunpack.c.l.b16 %v1324
        %v1419 = vunpack.c.l.b16 %v1325
        %v1420 = vpack.c.b16 %v1417, %v1416
        %v1421 = vpack.c.b16 %v1419, %v1418
        %v1425 = vsel %vm1127, %v1358, 0
        %1427 = vmatpush.bf16.msra.mxu0 0
        %1428 = vmatpush.bf16.msra.mxu0 0
        %1429 = vmatpush.bf16.msra.mxu0 0
        %1430 = vmatpush.bf16.msra.mxu0 0
        %1431 = vmatpush.bf16.msra.mxu0 0
        %1432 = vmatpush.bf16.msra.mxu0 0
        %1433 = vmatpush.bf16.msra.mxu0 %v1421
        %1434 = vmatpush.bf16.msra.mxu0 %v1420
        %1435 = vmatmul.bf16.gmra.mxu0 %v1425
        %v1436 = vpop.f32.mrf.mxu0
        %v1437 = vadd.f32 %v1409, %v1436
        %v1438 = vpop.f32.mrf.mxu0
        %1439 = vdwg.mxu0
        %1440 = vrot.lane.b32.xlu0 %v1361, 64
        %v1441 = vpop.permute.xlu0 %1440
        %v1443 = vsel %vm1221, %v1320, 0
        %v1446 = vsel %vm1341, %v1441, 0
        %1448 = vmatpush.bf16.msra.mxu0 0
        %1449 = vmatpush.bf16.msra.mxu0 0
        %1450 = vmatpush.bf16.msra.mxu0 0
        %1451 = vmatpush.bf16.msra.mxu0 0
        %1452 = vmatpush.bf16.msra.mxu0 0
        %1453 = vmatpush.bf16.msra.mxu0 0
        %1454 = vmatpush.bf16.msra.mxu0 0
        %1455 = vmatpush.bf16.msra.mxu0 %v1446
        %1456 = vmatmul.bf16.gmra.mxu0 %v1443
        %v1457 = vpop.f32.mrf.mxu0
        %v1458 = vadd.f32 0.0, %v1457
        %v1459 = vpop.f32.mrf.mxu0
        %1460 = vdwg.mxu0
        %v1461 = vpack.c.bf16 %v1458, %v1458
        %v1466 = vunpack.c.l.b16 %v1330
        %v1467 = vunpack.c.l.b16 %v1331
        %v1468 = vunpack.c.l.b16 %v1332
        %v1469 = vunpack.c.l.b16 %v1333
        %v1470 = vpack.c.b16 %v1467, %v1466
        %v1471 = vpack.c.b16 %v1469, %v1468
        %v1475 = vsel %vm1127, %v1461, 0
        %1477 = vmatpush.bf16.msra.mxu0 0
        %1478 = vmatpush.bf16.msra.mxu0 0
        %1479 = vmatpush.bf16.msra.mxu0 0
        %1480 = vmatpush.bf16.msra.mxu0 0
        %1481 = vmatpush.bf16.msra.mxu0 0
        %1482 = vmatpush.bf16.msra.mxu0 0
        %1483 = vmatpush.bf16.msra.mxu0 %v1471
        %1484 = vmatpush.bf16.msra.mxu0 %v1470
        %1485 = vmatmul.bf16.gmra.mxu0 %v1475
        %v1486 = vpop.f32.mrf.mxu0
        %v1487 = vadd.f32 0.0, %v1486
        %v1488 = vpop.f32.mrf.mxu0
        %1489 = vdwg.mxu0
        %v1490 = vadd.f32 %v1437, %v1487
        %1491 = vrot.lane.b32.xlu0 %v1361, 32
        %v1492 = vpop.permute.xlu0 %1491
        %v1494 = vsel %vm1221, %v1321, 0
        %v1497 = vsel %vm1341, %v1492, 0
        %1499 = vmatpush.bf16.msra.mxu0 0
        %1500 = vmatpush.bf16.msra.mxu0 0
        %1501 = vmatpush.bf16.msra.mxu0 0
        %1502 = vmatpush.bf16.msra.mxu0 0
        %1503 = vmatpush.bf16.msra.mxu0 0
        %1504 = vmatpush.bf16.msra.mxu0 0
        %1505 = vmatpush.bf16.msra.mxu0 0
        %1506 = vmatpush.bf16.msra.mxu0 %v1497
        %1507 = vmatmul.bf16.gmra.mxu0 %v1494
        %v1508 = vpop.f32.mrf.mxu0
        %v1509 = vadd.f32 0.0, %v1508
        %v1510 = vpop.f32.mrf.mxu0
        %1511 = vdwg.mxu0
        %v1512 = vpack.c.bf16 %v1509, %v1509
        %v1517 = vunpack.c.l.b16 %v1334
        %v1518 = vunpack.c.l.b16 %v1335
        %v1519 = vunpack.c.l.b16 %v1336
        %v1520 = vunpack.c.l.b16 %v1337
        %v1521 = vpack.c.b16 %v1518, %v1517
        %v1522 = vpack.c.b16 %v1520, %v1519
        %v1526 = vsel %vm1127, %v1512, 0
        %1528 = vmatpush.bf16.msra.mxu0 0
        %1529 = vmatpush.bf16.msra.mxu0 0
        %1530 = vmatpush.bf16.msra.mxu0 0
        %1531 = vmatpush.bf16.msra.mxu0 0
        %1532 = vmatpush.bf16.msra.mxu0 0
        %1533 = vmatpush.bf16.msra.mxu0 0
        %1534 = vmatpush.bf16.msra.mxu0 %v1522
        %1535 = vmatpush.bf16.msra.mxu0 %v1521
        %1536 = vmatmul.bf16.gmra.mxu0 %v1526
        %v1537 = vpop.f32.mrf.mxu0
        %v1538 = vadd.f32 0.0, %v1537
        %v1539 = vpop.f32.mrf.mxu0
        %1540 = vdwg.mxu0
        %v1541 = vadd.f32 %v1490, %v1538
        %v1542 = vadd.f32 %v875, %v1541
        %v1543 = vld [vmem:[%s727] sm:$0x1]
        %v1545 = vperm.slane %v1543, 0
        %v1547 = vadd.f32 %v1542, %v1545
        %v1548 = vld [vmem:[%s736] sm:$0x1]
        %v1549 = vld [vmem:[%s745] sm:$0x1]
        %1550 = vadd.xlane.f32.xlu0 %v1547
        %v1551 = vpop.xlane.xlu0 %1550
        %v1552 = vmul.f32 %v1551, %v886
        %v1553 = vmul.f32 %v1547, %v1547
        %1554 = vadd.xlane.f32.xlu0 %v1553
        %v1555 = vpop.xlane.xlu0 %1554
        %v1556 = vmul.f32 %v1555, %v886
        %v1557 = vmul.f32 %v1552, %v1552
        %v1558 = vsub.f32 %v1556, %v1557
        %v1559 = vadd.f32 %v1558, 1e-05
        %v1560 = vrsqrt.pop %v1559
        %v1561 = vmul.f32 %v1560, %v1559
        %v1562 = vmul.f32 %v1561, %v1560
        %v1563 = vmul.f32 0.5, %v1562
        %v1564 = vsub.f32 1.5, %v1563
        %v1565 = vmul.f32 %v1560, %v1564
        %vm1566 = vweird.f32 %v1559
        %vm1567 = vweird.f32 %v1560
        %vm1568 = vmor %vm1566, %vm1567
        %v1569 = vsel %vm1568, %v1560, %v1565
        %v1570 = vsub.f32 %v1547, %v1552
        %v1572 = vperm.slane %v1548, 0
        %v1574 = vmul.f32 %v1572, %v1569
        %v1575 = vmul.f32 %v1570, %v1574
        %v1577 = vperm.slane %v1549, 0
        %v1579 = vadd.f32 %v1575, %v1577
        %v1580 = vld [vmem:[%s755] sm:$0xff]
        %v1581 = vld [vmem:[%s755 + $0x8] sm:$0xff]
        %v1582 = vld [vmem:[%s755 + $0x10] sm:$0xff]
        %v1583 = vld [vmem:[%s755 + $0x18] sm:$0xff]
        %v1584 = vld [vmem:[%s755 + $0x20] sm:$0xff]
        %v1585 = vld [vmem:[%s755 + $0x28] sm:$0xff]
        %v1586 = vld [vmem:[%s755 + $0x30] sm:$0xff]
        %v1587 = vld [vmem:[%s755 + $0x38] sm:$0xff]
        %v1588 = vld [vmem:[%s755 + $0x40] sm:$0xff]
        %v1589 = vld [vmem:[%s755 + $0x48] sm:$0xff]
        %v1590 = vld [vmem:[%s755 + $0x50] sm:$0xff]
        %v1591 = vld [vmem:[%s755 + $0x58] sm:$0xff]
        %v1592 = vld [vmem:[%s755 + $0x60] sm:$0xff]
        %v1593 = vld [vmem:[%s755 + $0x68] sm:$0xff]
        %v1594 = vld [vmem:[%s755 + $0x70] sm:$0xff]
        %v1595 = vld [vmem:[%s755 + $0x78] sm:$0xff]
        %v1596 = vld [vmem:[%s755 + $0x80] sm:$0xff]
        %v1597 = vld [vmem:[%s755 + $0x88] sm:$0xff]
        %v1598 = vld [vmem:[%s755 + $0x90] sm:$0xff]
        %v1599 = vld [vmem:[%s755 + $0x98] sm:$0xff]
        %v1600 = vld [vmem:[%s755 + $0xa0] sm:$0xff]
        %v1601 = vld [vmem:[%s755 + $0xa8] sm:$0xff]
        %v1602 = vld [vmem:[%s755 + $0xb0] sm:$0xff]
        %v1603 = vld [vmem:[%s755 + $0xb8] sm:$0xff]
        %v1604 = vld [vmem:[%s755 + $0xc0] sm:$0xff]
        %v1605 = vld [vmem:[%s755 + $0xc8] sm:$0xff]
        %v1606 = vld [vmem:[%s755 + $0xd0] sm:$0xff]
        %v1607 = vld [vmem:[%s755 + $0xd8] sm:$0xff]
        %v1608 = vld [vmem:[%s755 + $0xe0] sm:$0xff]
        %v1609 = vld [vmem:[%s755 + $0xe8] sm:$0xff]
        %v1610 = vld [vmem:[%s755 + $0xf0] sm:$0xff]
        %v1611 = vld [vmem:[%s755 + $0xf8] sm:$0xff]
        %v1612 = vld [vmem:[%s864] sm:$0xf]
        %v1613 = vld [vmem:[%s765] sm:$0xf]
        %v1614 = vld [vmem:[%s765 + $0x4] sm:$0xf]
        %v1615 = vld [vmem:[%s765 + $0x8] sm:$0xf]
        %v1616 = vld [vmem:[%s765 + $0xc] sm:$0xf]
        %v1617 = vld [vmem:[%s765 + $0x10] sm:$0xf]
        %v1618 = vld [vmem:[%s765 + $0x14] sm:$0xf]
        %v1619 = vld [vmem:[%s765 + $0x18] sm:$0xf]
        %v1620 = vld [vmem:[%s765 + $0x1c] sm:$0xf]
        %v1621 = vld [vmem:[%s765 + $0x20] sm:$0xf]
        %v1622 = vld [vmem:[%s765 + $0x24] sm:$0xf]
        %v1623 = vld [vmem:[%s765 + $0x28] sm:$0xf]
        %v1624 = vld [vmem:[%s765 + $0x2c] sm:$0xf]
        %v1625 = vld [vmem:[%s765 + $0x30] sm:$0xf]
        %v1626 = vld [vmem:[%s765 + $0x34] sm:$0xf]
        %v1627 = vld [vmem:[%s765 + $0x38] sm:$0xf]
        %v1628 = vld [vmem:[%s765 + $0x3c] sm:$0xf]
        %v1629 = vld [vmem:[%s765 + $0x40] sm:$0xf]
        %v1630 = vld [vmem:[%s765 + $0x44] sm:$0xf]
        %v1631 = vld [vmem:[%s765 + $0x48] sm:$0xf]
        %v1632 = vld [vmem:[%s765 + $0x4c] sm:$0xf]
        %v1633 = vld [vmem:[%s765 + $0x50] sm:$0xf]
        %v1634 = vld [vmem:[%s765 + $0x54] sm:$0xf]
        %v1635 = vld [vmem:[%s765 + $0x58] sm:$0xf]
        %v1636 = vld [vmem:[%s765 + $0x5c] sm:$0xf]
        %v1637 = vld [vmem:[%s765 + $0x60] sm:$0xf]
        %v1638 = vld [vmem:[%s765 + $0x64] sm:$0xf]
        %v1639 = vld [vmem:[%s765 + $0x68] sm:$0xf]
        %v1640 = vld [vmem:[%s765 + $0x6c] sm:$0xf]
        %v1641 = vld [vmem:[%s765 + $0x70] sm:$0xf]
        %v1642 = vld [vmem:[%s765 + $0x74] sm:$0xf]
        %v1643 = vld [vmem:[%s765 + $0x78] sm:$0xf]
        %v1644 = vld [vmem:[%s765 + $0x7c] sm:$0xf]
        %v1645 = vld [vmem:[%s765 + $0x80] sm:$0xf]
        %v1646 = vld [vmem:[%s765 + $0x84] sm:$0xf]
        %v1647 = vld [vmem:[%s765 + $0x88] sm:$0xf]
        %v1648 = vld [vmem:[%s765 + $0x8c] sm:$0xf]
        %v1649 = vld [vmem:[%s765 + $0x90] sm:$0xf]
        %v1650 = vld [vmem:[%s765 + $0x94] sm:$0xf]
        %v1651 = vld [vmem:[%s765 + $0x98] sm:$0xf]
        %v1652 = vld [vmem:[%s765 + $0x9c] sm:$0xf]
        %v1653 = vld [vmem:[%s765 + $0xa0] sm:$0xf]
        %v1654 = vld [vmem:[%s765 + $0xa4] sm:$0xf]
        %v1655 = vld [vmem:[%s765 + $0xa8] sm:$0xf]
        %v1656 = vld [vmem:[%s765 + $0xac] sm:$0xf]
        %v1657 = vld [vmem:[%s765 + $0xb0] sm:$0xf]
        %v1658 = vld [vmem:[%s765 + $0xb4] sm:$0xf]
        %v1659 = vld [vmem:[%s765 + $0xb8] sm:$0xf]
        %v1660 = vld [vmem:[%s765 + $0xbc] sm:$0xf]
        %v1661 = vld [vmem:[%s765 + $0xc0] sm:$0xf]
        %v1662 = vld [vmem:[%s765 + $0xc4] sm:$0xf]
        %v1663 = vld [vmem:[%s765 + $0xc8] sm:$0xf]
        %v1664 = vld [vmem:[%s765 + $0xcc] sm:$0xf]
        %v1665 = vld [vmem:[%s765 + $0xd0] sm:$0xf]
        %v1666 = vld [vmem:[%s765 + $0xd4] sm:$0xf]
        %v1667 = vld [vmem:[%s765 + $0xd8] sm:$0xf]
        %v1668 = vld [vmem:[%s765 + $0xdc] sm:$0xf]
        %v1669 = vld [vmem:[%s765 + $0xe0] sm:$0xf]
        %v1670 = vld [vmem:[%s765 + $0xe4] sm:$0xf]
        %v1671 = vld [vmem:[%s765 + $0xe8] sm:$0xf]
        %v1672 = vld [vmem:[%s765 + $0xec] sm:$0xf]
        %v1673 = vld [vmem:[%s765 + $0xf0] sm:$0xf]
        %v1674 = vld [vmem:[%s765 + $0xf4] sm:$0xf]
        %v1675 = vld [vmem:[%s765 + $0xf8] sm:$0xf]
        %v1676 = vld [vmem:[%s765 + $0xfc] sm:$0xf]
        %v1677 = vld [vmem:[%s867] sm:$0x1]
        %v1678 = vpack.c.bf16 %v1579, %v1579
        %v1680 = vperm.slane %v1612, 0
        %v1681 = vperm.slane %v1612, 1
        %v1682 = vperm.slane %v1612, 2
        %v1683 = vperm.slane %v1612, 3
        %v1720 = vunpack.c.l.b16 %v1580
        %v1721 = vunpack.c.h.b16 %v1580
        %v1722 = vunpack.c.l.b16 %v1581
        %v1723 = vunpack.c.h.b16 %v1581
        %v1724 = vunpack.c.l.b16 %v1582
        %v1725 = vunpack.c.h.b16 %v1582
        %v1726 = vunpack.c.l.b16 %v1583
        %v1727 = vunpack.c.h.b16 %v1583
        %v1728 = vunpack.c.l.b16 %v1584
        %v1729 = vunpack.c.h.b16 %v1584
        %v1730 = vunpack.c.l.b16 %v1585
        %v1731 = vunpack.c.h.b16 %v1585
        %v1732 = vunpack.c.l.b16 %v1586
        %v1733 = vunpack.c.h.b16 %v1586
        %v1734 = vunpack.c.l.b16 %v1587
        %v1735 = vunpack.c.h.b16 %v1587
        %v1736 = vunpack.c.l.b16 %v1588
        %v1737 = vunpack.c.h.b16 %v1588
        %v1738 = vunpack.c.l.b16 %v1589
        %v1739 = vunpack.c.h.b16 %v1589
        %v1740 = vunpack.c.l.b16 %v1590
        %v1741 = vunpack.c.h.b16 %v1590
        %v1742 = vunpack.c.l.b16 %v1591
        %v1743 = vunpack.c.h.b16 %v1591
        %v1744 = vunpack.c.l.b16 %v1592
        %v1745 = vunpack.c.h.b16 %v1592
        %v1746 = vunpack.c.l.b16 %v1593
        %v1747 = vunpack.c.h.b16 %v1593
        %v1748 = vunpack.c.l.b16 %v1594
        %v1749 = vunpack.c.h.b16 %v1594
        %v1750 = vunpack.c.l.b16 %v1595
        %v1751 = vunpack.c.h.b16 %v1595
        %v1752 = vunpack.c.l.b16 %v1596
        %v1753 = vunpack.c.h.b16 %v1596
        %v1754 = vunpack.c.l.b16 %v1597
        %v1755 = vunpack.c.h.b16 %v1597
        %v1756 = vunpack.c.l.b16 %v1598
        %v1757 = vunpack.c.h.b16 %v1598
        %v1758 = vunpack.c.l.b16 %v1599
        %v1759 = vunpack.c.h.b16 %v1599
        %v1760 = vunpack.c.l.b16 %v1600
        %v1761 = vunpack.c.h.b16 %v1600
        %v1762 = vunpack.c.l.b16 %v1601
        %v1763 = vunpack.c.h.b16 %v1601
        %v1764 = vunpack.c.l.b16 %v1602
        %v1765 = vunpack.c.h.b16 %v1602
        %v1766 = vunpack.c.l.b16 %v1603
        %v1767 = vunpack.c.h.b16 %v1603
        %v1768 = vunpack.c.l.b16 %v1604
        %v1769 = vunpack.c.h.b16 %v1604
        %v1770 = vunpack.c.l.b16 %v1605
        %v1771 = vunpack.c.h.b16 %v1605
        %v1772 = vunpack.c.l.b16 %v1606
        %v1773 = vunpack.c.h.b16 %v1606
        %v1774 = vunpack.c.l.b16 %v1607
        %v1775 = vunpack.c.h.b16 %v1607
        %v1776 = vunpack.c.l.b16 %v1608
        %v1777 = vunpack.c.h.b16 %v1608
        %v1778 = vunpack.c.l.b16 %v1609
        %v1779 = vunpack.c.h.b16 %v1609
        %v1780 = vunpack.c.l.b16 %v1610
        %v1781 = vunpack.c.h.b16 %v1610
        %v1782 = vunpack.c.l.b16 %v1611
        %v1783 = vunpack.c.h.b16 %v1611
        %v1784 = vpack.c.b16 %v1724, %v1720
        %v1785 = vpack.c.b16 %v1725, %v1721
        %v1786 = vpack.c.b16 %v1726, %v1722
        %v1787 = vpack.c.b16 %v1727, %v1723
        %v1788 = vpack.c.b16 %v1732, %v1728
        %v1789 = vpack.c.b16 %v1733, %v1729
        %v1790 = vpack.c.b16 %v1734, %v1730
        %v1791 = vpack.c.b16 %v1735, %v1731
        %v1792 = vpack.c.b16 %v1740, %v1736
        %v1793 = vpack.c.b16 %v1741, %v1737
        %v1794 = vpack.c.b16 %v1742, %v1738
        %v1795 = vpack.c.b16 %v1743, %v1739
        %v1796 = vpack.c.b16 %v1748, %v1744
        %v1797 = vpack.c.b16 %v1749, %v1745
        %v1798 = vpack.c.b16 %v1750, %v1746
        %v1799 = vpack.c.b16 %v1751, %v1747
        %v1800 = vpack.c.b16 %v1756, %v1752
        %v1801 = vpack.c.b16 %v1757, %v1753
        %v1802 = vpack.c.b16 %v1758, %v1754
        %v1803 = vpack.c.b16 %v1759, %v1755
        %v1804 = vpack.c.b16 %v1764, %v1760
        %v1805 = vpack.c.b16 %v1765, %v1761
        %v1806 = vpack.c.b16 %v1766, %v1762
        %v1807 = vpack.c.b16 %v1767, %v1763
        %v1808 = vpack.c.b16 %v1772, %v1768
        %v1809 = vpack.c.b16 %v1773, %v1769
        %v1810 = vpack.c.b16 %v1774, %v1770
        %v1811 = vpack.c.b16 %v1775, %v1771
        %v1812 = vpack.c.b16 %v1780, %v1776
        %v1813 = vpack.c.b16 %v1781, %v1777
        %v1814 = vpack.c.b16 %v1782, %v1778
        %v1815 = vpack.c.b16 %v1783, %v1779
        %1848 = vmatpush.bf16.msra.mxu0 %v1812
        %1849 = vmatpush.bf16.msra.mxu0 %v1808
        %1850 = vmatpush.bf16.msra.mxu0 %v1804
        %1851 = vmatpush.bf16.msra.mxu0 %v1800
        %1852 = vmatpush.bf16.msra.mxu0 %v1796
        %1853 = vmatpush.bf16.msra.mxu0 %v1792
        %1854 = vmatpush.bf16.msra.mxu0 %v1788
        %1855 = vmatpush.bf16.msra.mxu0 %v1784
        %1856 = vmatmul.bf16.gmra.mxu0 %v1678
        %v1857 = vpop.f32.mrf.mxu0
        %v1858 = vadd.f32 %v1680, %v1857
        %v1859 = vpop.f32.mrf.mxu0
        %1860 = vdwg.mxu0
        %1861 = vmatpush.bf16.msra.mxu0 %v1813
        %1862 = vmatpush.bf16.msra.mxu0 %v1809
        %1863 = vmatpush.bf16.msra.mxu0 %v1805
        %1864 = vmatpush.bf16.msra.mxu0 %v1801
        %1865 = vmatpush.bf16.msra.mxu0 %v1797
        %1866 = vmatpush.bf16.msra.mxu0 %v1793
        %1867 = vmatpush.bf16.msra.mxu0 %v1789
        %1868 = vmatpush.bf16.msra.mxu0 %v1785
        %1869 = vmatmul.bf16.gmra.mxu0 %v1678
        %v1870 = vpop.f32.mrf.mxu0
        %v1871 = vadd.f32 %v1681, %v1870
        %v1872 = vpop.f32.mrf.mxu0
        %1873 = vdwg.mxu0
        %1874 = vmatpush.bf16.msra.mxu0 %v1814
        %1875 = vmatpush.bf16.msra.mxu0 %v1810
        %1876 = vmatpush.bf16.msra.mxu0 %v1806
        %1877 = vmatpush.bf16.msra.mxu0 %v1802
        %1878 = vmatpush.bf16.msra.mxu0 %v1798
        %1879 = vmatpush.bf16.msra.mxu0 %v1794
        %1880 = vmatpush.bf16.msra.mxu0 %v1790
        %1881 = vmatpush.bf16.msra.mxu0 %v1786
        %1882 = vmatmul.bf16.gmra.mxu0 %v1678
        %v1883 = vpop.f32.mrf.mxu0
        %v1884 = vadd.f32 %v1682, %v1883
        %v1885 = vpop.f32.mrf.mxu0
        %1886 = vdwg.mxu0
        %1887 = vmatpush.bf16.msra.mxu0 %v1815
        %1888 = vmatpush.bf16.msra.mxu0 %v1811
        %1889 = vmatpush.bf16.msra.mxu0 %v1807
        %1890 = vmatpush.bf16.msra.mxu0 %v1803
        %1891 = vmatpush.bf16.msra.mxu0 %v1799
        %1892 = vmatpush.bf16.msra.mxu0 %v1795
        %1893 = vmatpush.bf16.msra.mxu0 %v1791
        %1894 = vmatpush.bf16.msra.mxu0 %v1787
        %1895 = vmatmul.bf16.gmra.mxu0 %v1678
        %v1896 = vpop.f32.mrf.mxu0
        %v1897 = vadd.f32 %v1683, %v1896
        %v1898 = vpop.f32.mrf.mxu0
        %1899 = vdwg.mxu0
        %v1900 = vmul.f32 %v1858, 1.702
        %v1901 = vmul.f32 %v1871, 1.702
        %v1902 = vmul.f32 %v1884, 1.702
        %v1903 = vmul.f32 %v1897, 1.702
        %v1904 = vxor.u32 %v1900, 2147483648
        %v1905 = vxor.u32 %v1901, 2147483648
        %v1906 = vxor.u32 %v1902, 2147483648
        %v1907 = vxor.u32 %v1903, 2147483648
        %v1908 = vmul.f32 %v1904, 1.442695
        %v1909 = vpow.pop %v1908
        %v1910 = vmul.f32 %v1905, 1.442695
        %v1911 = vpow.pop %v1910
        %v1912 = vmul.f32 %v1906, 1.442695
        %v1913 = vpow.pop %v1912
        %v1914 = vmul.f32 %v1907, 1.442695
        %v1915 = vpow.pop %v1914
        %v1916 = vadd.f32 %v1909, 1.0
        %v1917 = vadd.f32 %v1911, 1.0
        %v1918 = vadd.f32 %v1913, 1.0
        %v1919 = vadd.f32 %v1915, 1.0
        %v1920 = vrcp.pop %v1916
        %v1921 = vmul.f32 %v1916, %v1920
        %v1922 = vsub.f32 1.0, %v1921
        %v1923 = vmul.f32 %v1920, %v1922
        %v1924 = vadd.f32 %v1920, %v1923
        %vm1925 = vweird.f32 %v1916
        %vm1926 = vweird.f32 %v1920
        %vm1927 = vmor %vm1925, %vm1926
        %v1928 = vsel %vm1927, %v1920, %v1924
        %v1929 = vand.u32 2147483647, %v1916
        %vm1930 = vcmp.eq.f32.partialorder %v1929, 8.507059e+37
        %v1931 = vand.u32 %v1916, 2147483648
        %v1932 = vor.u32 1.1754944e-38, %v1931
        %v1933 = vsel %vm1930, %v1932, %v1928
        %v1934 = vmul.f32 1.0, %v1933
        %v1935 = vrcp.pop %v1917
        %v1936 = vmul.f32 %v1917, %v1935
        %v1937 = vsub.f32 1.0, %v1936
        %v1938 = vmul.f32 %v1935, %v1937
        %v1939 = vadd.f32 %v1935, %v1938
        %vm1940 = vweird.f32 %v1917
        %vm1941 = vweird.f32 %v1935
        %vm1942 = vmor %vm1940, %vm1941
        %v1943 = vsel %vm1942, %v1935, %v1939
        %v1944 = vand.u32 2147483647, %v1917
        %vm1945 = vcmp.eq.f32.partialorder %v1944, 8.507059e+37
        %v1946 = vand.u32 %v1917, 2147483648
        %v1947 = vor.u32 1.1754944e-38, %v1946
        %v1948 = vsel %vm1945, %v1947, %v1943
        %v1949 = vmul.f32 1.0, %v1948
        %v1950 = vrcp.pop %v1918
        %v1951 = vmul.f32 %v1918, %v1950
        %v1952 = vsub.f32 1.0, %v1951
        %v1953 = vmul.f32 %v1950, %v1952
        %v1954 = vadd.f32 %v1950, %v1953
        %vm1955 = vweird.f32 %v1918
        %vm1956 = vweird.f32 %v1950
        %vm1957 = vmor %vm1955, %vm1956
        %v1958 = vsel %vm1957, %v1950, %v1954
        %v1959 = vand.u32 2147483647, %v1918
        %vm1960 = vcmp.eq.f32.partialorder %v1959, 8.507059e+37
        %v1961 = vand.u32 %v1918, 2147483648
        %v1962 = vor.u32 1.1754944e-38, %v1961
        %v1963 = vsel %vm1960, %v1962, %v1958
        %v1964 = vmul.f32 1.0, %v1963
        %v1965 = vrcp.pop %v1919
        %v1966 = vmul.f32 %v1919, %v1965
        %v1967 = vsub.f32 1.0, %v1966
        %v1968 = vmul.f32 %v1965, %v1967
        %v1969 = vadd.f32 %v1965, %v1968
        %vm1970 = vweird.f32 %v1919
        %vm1971 = vweird.f32 %v1965
        %vm1972 = vmor %vm1970, %vm1971
        %v1973 = vsel %vm1972, %v1965, %v1969
        %v1974 = vand.u32 2147483647, %v1919
        %vm1975 = vcmp.eq.f32.partialorder %v1974, 8.507059e+37
        %v1976 = vand.u32 %v1919, 2147483648
        %v1977 = vor.u32 1.1754944e-38, %v1976
        %v1978 = vsel %vm1975, %v1977, %v1973
        %v1979 = vmul.f32 1.0, %v1978
        %v1980 = vmul.f32 %v1858, %v1934
        %v1981 = vmul.f32 %v1871, %v1949
        %v1982 = vmul.f32 %v1884, %v1964
        %v1983 = vmul.f32 %v1897, %v1979
        %v1984 = vpack.c.bf16 %v1980, %v1980
        %v1985 = vpack.c.bf16 %v1981, %v1981
        %v1986 = vpack.c.bf16 %v1982, %v1982
        %v1987 = vpack.c.bf16 %v1983, %v1983
        %v1989 = vperm.slane %v1677, 0
        %v2055 = vunpack.c.l.b16 %v1613
        %v2056 = vunpack.c.l.b16 %v1614
        %v2057 = vunpack.c.l.b16 %v1615
        %v2058 = vunpack.c.l.b16 %v1616
        %v2059 = vunpack.c.l.b16 %v1617
        %v2060 = vunpack.c.l.b16 %v1618
        %v2061 = vunpack.c.l.b16 %v1619
        %v2062 = vunpack.c.l.b16 %v1620
        %v2063 = vunpack.c.l.b16 %v1621
        %v2064 = vunpack.c.l.b16 %v1622
        %v2065 = vunpack.c.l.b16 %v1623
        %v2066 = vunpack.c.l.b16 %v1624
        %v2067 = vunpack.c.l.b16 %v1625
        %v2068 = vunpack.c.l.b16 %v1626
        %v2069 = vunpack.c.l.b16 %v1627
        %v2070 = vunpack.c.l.b16 %v1628
        %v2071 = vunpack.c.l.b16 %v1629
        %v2072 = vunpack.c.l.b16 %v1630
        %v2073 = vunpack.c.l.b16 %v1631
        %v2074 = vunpack.c.l.b16 %v1632
        %v2075 = vunpack.c.l.b16 %v1633
        %v2076 = vunpack.c.l.b16 %v1634
        %v2077 = vunpack.c.l.b16 %v1635
        %v2078 = vunpack.c.l.b16 %v1636
        %v2079 = vunpack.c.l.b16 %v1637
        %v2080 = vunpack.c.l.b16 %v1638
        %v2081 = vunpack.c.l.b16 %v1639
        %v2082 = vunpack.c.l.b16 %v1640
        %v2083 = vunpack.c.l.b16 %v1641
        %v2084 = vunpack.c.l.b16 %v1642
        %v2085 = vunpack.c.l.b16 %v1643
        %v2086 = vunpack.c.l.b16 %v1644
        %v2087 = vunpack.c.l.b16 %v1645
        %v2088 = vunpack.c.l.b16 %v1646
        %v2089 = vunpack.c.l.b16 %v1647
        %v2090 = vunpack.c.l.b16 %v1648
        %v2091 = vunpack.c.l.b16 %v1649
        %v2092 = vunpack.c.l.b16 %v1650
        %v2093 = vunpack.c.l.b16 %v1651
        %v2094 = vunpack.c.l.b16 %v1652
        %v2095 = vunpack.c.l.b16 %v1653
        %v2096 = vunpack.c.l.b16 %v1654
        %v2097 = vunpack.c.l.b16 %v1655
        %v2098 = vunpack.c.l.b16 %v1656
        %v2099 = vunpack.c.l.b16 %v1657
        %v2100 = vunpack.c.l.b16 %v1658
        %v2101 = vunpack.c.l.b16 %v1659
        %v2102 = vunpack.c.l.b16 %v1660
        %v2103 = vunpack.c.l.b16 %v1661
        %v2104 = vunpack.c.l.b16 %v1662
        %v2105 = vunpack.c.l.b16 %v1663
        %v2106 = vunpack.c.l.b16 %v1664
        %v2107 = vunpack.c.l.b16 %v1665
        %v2108 = vunpack.c.l.b16 %v1666
        %v2109 = vunpack.c.l.b16 %v1667
        %v2110 = vunpack.c.l.b16 %v1668
        %v2111 = vunpack.c.l.b16 %v1669
        %v2112 = vunpack.c.l.b16 %v1670
        %v2113 = vunpack.c.l.b16 %v1671
        %v2114 = vunpack.c.l.b16 %v1672
        %v2115 = vunpack.c.l.b16 %v1673
        %v2116 = vunpack.c.l.b16 %v1674
        %v2117 = vunpack.c.l.b16 %v1675
        %v2118 = vunpack.c.l.b16 %v1676
        %v2119 = vpack.c.b16 %v2056, %v2055
        %v2120 = vpack.c.b16 %v2058, %v2057
        %v2121 = vpack.c.b16 %v2060, %v2059
        %v2122 = vpack.c.b16 %v2062, %v2061
        %v2123 = vpack.c.b16 %v2064, %v2063
        %v2124 = vpack.c.b16 %v2066, %v2065
        %v2125 = vpack.c.b16 %v2068, %v2067
        %v2126 = vpack.c.b16 %v2070, %v2069
        %v2127 = vpack.c.b16 %v2072, %v2071
        %v2128 = vpack.c.b16 %v2074, %v2073
        %v2129 = vpack.c.b16 %v2076, %v2075
        %v2130 = vpack.c.b16 %v2078, %v2077
        %v2131 = vpack.c.b16 %v2080, %v2079
        %v2132 = vpack.c.b16 %v2082, %v2081
        %v2133 = vpack.c.b16 %v2084, %v2083
        %v2134 = vpack.c.b16 %v2086, %v2085
        %v2135 = vpack.c.b16 %v2088, %v2087
        %v2136 = vpack.c.b16 %v2090, %v2089
        %v2137 = vpack.c.b16 %v2092, %v2091
        %v2138 = vpack.c.b16 %v2094, %v2093
        %v2139 = vpack.c.b16 %v2096, %v2095
        %v2140 = vpack.c.b16 %v2098, %v2097
        %v2141 = vpack.c.b16 %v2100, %v2099
        %v2142 = vpack.c.b16 %v2102, %v2101
        %v2143 = vpack.c.b16 %v2104, %v2103
        %v2144 = vpack.c.b16 %v2106, %v2105
        %v2145 = vpack.c.b16 %v2108, %v2107
        %v2146 = vpack.c.b16 %v2110, %v2109
        %v2147 = vpack.c.b16 %v2112, %v2111
        %v2148 = vpack.c.b16 %v2114, %v2113
        %v2149 = vpack.c.b16 %v2116, %v2115
        %v2150 = vpack.c.b16 %v2118, %v2117
        %2183 = vmatpush.bf16.msra.mxu0 %v2126
        %2184 = vmatpush.bf16.msra.mxu0 %v2125
        %2185 = vmatpush.bf16.msra.mxu0 %v2124
        %2186 = vmatpush.bf16.msra.mxu0 %v2123
        %2187 = vmatpush.bf16.msra.mxu0 %v2122
        %2188 = vmatpush.bf16.msra.mxu0 %v2121
        %2189 = vmatpush.bf16.msra.mxu0 %v2120
        %2190 = vmatpush.bf16.msra.mxu0 %v2119
        %2191 = vmatmul.bf16.gmra.mxu0 %v1984
        %v2192 = vpop.f32.mrf.mxu0
        %v2193 = vadd.f32 %v1989, %v2192
        %v2194 = vpop.f32.mrf.mxu0
        %2195 = vdwg.mxu0
        %2196 = vmatpush.bf16.msra.mxu0 %v2134
        %2197 = vmatpush.bf16.msra.mxu0 %v2133
        %2198 = vmatpush.bf16.msra.mxu0 %v2132
        %2199 = vmatpush.bf16.msra.mxu0 %v2131
        %2200 = vmatpush.bf16.msra.mxu0 %v2130
        %2201 = vmatpush.bf16.msra.mxu0 %v2129
        %2202 = vmatpush.bf16.msra.mxu0 %v2128
        %2203 = vmatpush.bf16.msra.mxu0 %v2127
        %2204 = vmatmul.bf16.gmra.mxu0 %v1985
        %v2205 = vpop.f32.mrf.mxu0
        %v2206 = vadd.f32 %v2193, %v2205
        %v2207 = vpop.f32.mrf.mxu0
        %2208 = vdwg.mxu0
        %2209 = vmatpush.bf16.msra.mxu0 %v2142
        %2210 = vmatpush.bf16.msra.mxu0 %v2141
        %2211 = vmatpush.bf16.msra.mxu0 %v2140
        %2212 = vmatpush.bf16.msra.mxu0 %v2139
        %2213 = vmatpush.bf16.msra.mxu0 %v2138
        %2214 = vmatpush.bf16.msra.mxu0 %v2137
        %2215 = vmatpush.bf16.msra.mxu0 %v2136
        %2216 = vmatpush.bf16.msra.mxu0 %v2135
        %2217 = vmatmul.bf16.gmra.mxu0 %v1986
        %v2218 = vpop.f32.mrf.mxu0
        %v2219 = vadd.f32 %v2206, %v2218
        %v2220 = vpop.f32.mrf.mxu0
        %2221 = vdwg.mxu0
        %2222 = vmatpush.bf16.msra.mxu0 %v2150
        %2223 = vmatpush.bf16.msra.mxu0 %v2149
        %2224 = vmatpush.bf16.msra.mxu0 %v2148
        %2225 = vmatpush.bf16.msra.mxu0 %v2147
        %2226 = vmatpush.bf16.msra.mxu0 %v2146
        %2227 = vmatpush.bf16.msra.mxu0 %v2145
        %2228 = vmatpush.bf16.msra.mxu0 %v2144
        %2229 = vmatpush.bf16.msra.mxu0 %v2143
        %2230 = vmatmul.bf16.gmra.mxu0 %v1987
        %v2231 = vpop.f32.mrf.mxu0
        %v2232 = vadd.f32 %v2219, %v2231
        %v2233 = vpop.f32.mrf.mxu0
        %2234 = vdwg.mxu0
        %v2235 = vadd.f32 %v1547, %v2232
        %2236 = vst [vmem:[%s860] sm:$0xff] %v2235
        %s2237 = sand.u32 %s403, 1
        %s2238 = scalar_lea.sflag [#allocation4], %s2237
        %s2239 = sand.u32 %s403, 1
        %s2240 = smul.addr %s2239, 8
        %s2241 = scalar_lea.vmem [#allocation20], %s2240
        // Predicated region
        $region121: #{tpu_custom_call.1} parent=71 // pred_check
          %p2242 = pneg %p413
        $region122: #{tpu_custom_call.1} parent=71 // pred_check_branch
          %2244 = sbr.rel (%p2242) target = $region124
        $region123: #{tpu_custom_call.1} parent=71 // pred_region
          %2246 = vsyncadd %s2238, 0
          %s2247 = smul.addr %s49, 8
          %s2248 = scalar_lea.hbm %s13, %s2247
          %s2250 = sshll.u32 %s2241, 4
          %s2251 = int_to_ptr.vmem [resolvable:$true] %s2250
          %s2252 = sshll.u32 %s2248, 4
          %s2253 = int_to_ptr.hbm [resolvable:$true] %s2252
          %2255 = dma.vmem_to_hbm [thread:$0]  %s2251, 128, %s2253, %s2238
        $region124: #{tpu_custom_call.1} parent=71 // pred_fallthru
          _
      $region72: #{tpu_custom_call.1} parent=5 // pred_fallthru
        _
      %p2256 = scmp.le.s32.totalorder 2, %s40
      // Predicated region
      $region125: #{tpu_custom_call.1} parent=5 // pred_check
        %p2257 = pneg %p2256
      $region126: #{tpu_custom_call.1} parent=5 // pred_check_branch
        %2259 = sbr.rel (%p2257) target = $region128
      $region127: #{tpu_custom_call.1} parent=5 // pred_region
        %s2260 = ssub.s32 %s40, 2
        // Predicated region
        $region129: #{tpu_custom_call.1} parent=127 // pred_check
          %p2261 = pneg %p419
        $region130: #{tpu_custom_call.1} parent=127 // pred_check_branch
          %2263 = sbr.rel (%p2261) target = $region132
        $region131: #{tpu_custom_call.1} parent=127 // pred_region
          %s2264 = sand.u32 %s404, 1
          %s2265 = scalar_lea.sflag [#allocation4], %s2264
          %s2266 = sand.u32 %s404, 1
          %s2267 = smul.addr %s2266, 8
          %s2268 = scalar_lea.vmem [#allocation20], %s2267
          %2270 = dma.done %s2265, 128
        $region132: #{tpu_custom_call.1} parent=127 // pred_fallthru
          _
      $region128: #{tpu_custom_call.1} parent=5 // pred_fallthru
        _
    $region6: #{tpu_custom_call.1} parent=1 // loop_footer
      %s44 = sadd.s32 1, %s40
    $region7: #{tpu_custom_call.1} parent=1 // loop_footer_branch
      %39 = sbr.rel target = $region3
    $region8: #{tpu_custom_call.1} parent=1 // loop_exit
      _
    %2271 = vsyncpa [#allocation3], 1
    %s2272 = scalar_lea.sflag [#allocation3], 1
    %2273 = vsyncpa %s2272, 1
    %2274 = vsyncpa [#allocation6], 1
    %s2275 = scalar_lea.sflag [#allocation6], 1
    %2276 = vsyncpa %s2275, 1
    %2277 = vsyncpa [#allocation9], 1
    %s2278 = scalar_lea.sflag [#allocation9], 1
    %2279 = vsyncpa %s2278, 1
    %2280 = vsyncpa [#allocation12], 1
    %s2281 = scalar_lea.sflag [#allocation12], 1
    %2282 = vsyncpa %s2281, 1
    %2283 = vsyncpa [#allocation15], 1
    %s2284 = scalar_lea.sflag [#allocation15], 1
    %2285 = vsyncpa %s2284, 1
    %2286 = vsyncpa [#allocation18], 1
    %s2287 = scalar_lea.sflag [#allocation18], 1
    %2288 = vsyncpa %s2287, 1
    %2289 = vsyncpa [#allocation4], 1
    %s2290 = scalar_lea.sflag [#allocation4], 1
    %2291 = vsyncpa %s2290, 1

</llo_original>
